<compile_context>
chip_gen: v7x
topology: tpu7x:2x2x1
jax: 0.10.0
libtpu: 0.0.40
codegen_flags: <defaults>
</compile_context>

<pallas_src>
import functools

import jax
import jax.numpy as jnp
from jax import lax
from jax.experimental import pallas as pl
from jax.experimental.pallas import tpu as pltpu


def _sigmoid(x):
    # One EUP op (tanh) instead of exp + reciprocal.
    return 0.5 * jnp.tanh(0.5 * x) + 0.5


# ----------------------------------------------------------------------------
# Pallas kernel: one (direction, time-chunk) grid step of a biLSTM layer.
# grid = (2, num_chunks); direction is independent ("parallel"), chunks carry
# the recurrent state in VMEM scratch ("arbitrary").
# ----------------------------------------------------------------------------
def _bilstm_kernel(xg_ref, v_ref, whh_ref, o_ref, h_sc, c_sc, *,
                   hidden, t_chunk):
    """
    xg_ref : (1, t_chunk, B, 4H) f32  precomputed x @ W_ih^T + (b_ih + b_hh)
    v_ref  : (t_chunk, B, 1)     f32  validity mask (1.0 = real token)
    whh_ref: (1, H, 4H)          bf16 recurrent weights (resident per direction)
    o_ref  : (1, t_chunk, B, H)  f32  per-direction hidden outputs
    h_sc/c_sc: (B, H)            f32  carried LSTM state (persists over chunks)
    """
    H = hidden
    d = pl.program_id(0)       # 0 = forward, 1 = backward
    tc = pl.program_id(1)      # chunk index along the (possibly reversed) time

    @pl.when(tc == 0)
    def _():
        h_sc[...] = jnp.zeros_like(h_sc)
        c_sc[...] = jnp.zeros_like(c_sc)

    whh = whh_ref[0]           # (H, 4H) bf16 — hoisted out of the step loop

    def run_chunk(reverse):
        # Fully static (unrolled) walk over the chunk; all VMEM addresses are
        # compile-time constants for this direction's code path.
        h = h_sc[...]
        c = c_sc[...]
        for s in range(t_chunk):
            lt = (t_chunk - 1 - s) if reverse else s

            x_gates = xg_ref[0, lt]          # (B, 4H) f32, static index
            valid = v_ref[lt]                # (B, 1)  f32

            gates = x_gates + jnp.dot(h.astype(jnp.bfloat16), whh,
                                      preferred_element_type=jnp.float32)
            i_g = _sigmoid(gates[:, 0 * H:1 * H])
            f_g = _sigmoid(gates[:, 1 * H:2 * H])
            g_g = jnp.tanh(gates[:, 2 * H:3 * H])
            o_g = _sigmoid(gates[:, 3 * H:4 * H])

            c_new = f_g * c + i_g * g_g
            h_new = o_g * jnp.tanh(c_new)

            # packed-sequence semantics: padded positions emit zeros and do
            # not advance the state.
            o_ref[0, lt] = h_new * valid
            keep = valid > 0.0
            h = jnp.where(keep, h_new, h)
            c = jnp.where(keep, c_new, c)
        h_sc[...] = h
        c_sc[...] = c

    @pl.when(d == 0)
    def _():
        run_chunk(reverse=False)

    @pl.when(d == 1)
    def _():
        run_chunk(reverse=True)


# ----------------------------------------------------------------------------
# One bidirectional LSTM layer.
# ----------------------------------------------------------------------------
def bilstm_layer(x_tbd, valid_tb1, w_ih, w_hh, bias, *, t_chunk=16):
    """
    x_tbd    : (T, B, D)  f32   time-major input
    valid_tb1: (T, B, 1)  f32   1.0 = real token, 0.0 = padding
    w_ih     : (2, D, 4H) bf16  [fwd, bwd] input weights (pre-transposed)
    w_hh     : (2, H, 4H) bf16  [fwd, bwd] recurrent weights (pre-transposed)
    bias     : (2, 4H)    f32   b_ih + b_hh per direction
    returns  : (T, B, 2H) f32   [fwd ; bwd], zeros at padded positions
    """
    T, B, _D = x_tbd.shape
    H = w_hh.shape[1]

    # Hoisted input projection: one large bf16 matmul (f32 accumulation) for
    # all time steps and both directions — the serial kernel never sees W_ih.
    xg = jnp.einsum("tbd,zdg->ztbg", x_tbd.astype(jnp.bfloat16), w_ih,
                    preferred_element_type=jnp.float32)
    xg = xg + bias[:, None, None, :]                     # (2, T, B, 4H) f32

    tc_size = min(t_chunk, T)
    t_pad = pl.cdiv(T, tc_size) * tc_size
    if t_pad != T:
        # Padded tail steps carry valid=0: state freezes, outputs are zero.
        xg = jnp.pad(xg, ((0, 0), (0, t_pad - T), (0, 0), (0, 0)))
        valid_tb1 = jnp.pad(valid_tb1, ((0, t_pad - T), (0, 0), (0, 0)))
    nc = t_pad // tc_size

    def chunk_idx(d, t):
        # fwd visits chunks 0..nc-1; bwd visits nc-1..0 (pure index_map
        # reversal, no data movement).
        return (1 - d) * t + d * (nc - 1 - t)

    kernel = functools.partial(_bilstm_kernel, hidden=H, t_chunk=tc_size)
    out = pl.pallas_call(
        kernel,
        out_shape=jax.ShapeDtypeStruct((2, t_pad, B, H), jnp.float32),
        grid_spec=pltpu.PrefetchScalarGridSpec(
            num_scalar_prefetch=0,
            grid=(2, nc),
            in_specs=[
                pl.BlockSpec((1, tc_size, B, 4 * H),
                             lambda d, t: (d, chunk_idx(d, t), 0, 0)),
                pl.BlockSpec((tc_size, B, 1),
                             lambda d, t: (chunk_idx(d, t), 0, 0)),
                pl.BlockSpec((1, H, 4 * H), lambda d, t: (d, 0, 0)),
            ],
            out_specs=pl.BlockSpec((1, tc_size, B, H),
                                   lambda d, t: (d, chunk_idx(d, t), 0, 0)),
            scratch_shapes=[
                pltpu.VMEM((B, H), jnp.float32),   # h state
                pltpu.VMEM((B, H), jnp.float32),   # c state
            ],
        ),
        compiler_params=pltpu.CompilerParams(
            # direction axis independent -> megacore-parallel on v7x;
            # the chunk axis carries the recurrence -> "arbitrary".
            dimension_semantics=("parallel", "arbitrary")),
    )(xg, valid_tb1, w_hh)

    out = out[:, :T]                                     # (2, T, B, H)
    return jnp.concatenate([out[0], out[1]], axis=-1)    # (T, B, 2H)


# ----------------------------------------------------------------------------
# Parameter init (deterministic, PyTorch LSTM uniform(-1/sqrt(H), 1/sqrt(H)))
# ----------------------------------------------------------------------------
def init_stacked_brnn_params(key, input_size, hidden_size, num_layers):
    params = []
    d_in = input_size
    bound = 1.0 / (hidden_size ** 0.5)
    for _ in range(num_layers):
        w_ih_dirs, w_hh_dirs, b_dirs = [], [], []
        for _direction in range(2):               # 0 = fwd, 1 = bwd
            key, k1, k2, k3, k4 = jax.random.split(key, 5)
            w_ih = jax.random.uniform(k1, (4 * hidden_size, d_in),
                                      jnp.float32, -bound, bound)
            w_hh = jax.random.uniform(k2, (4 * hidden_size, hidden_size),
                                      jnp.float32, -bound, bound)
            b_ih = jax.random.uniform(k3, (4 * hidden_size,),
                                      jnp.float32, -bound, bound)
            b_hh = jax.random.uniform(k4, (4 * hidden_size,),
                                      jnp.float32, -bound, bound)
            w_ih_dirs.append(w_ih.T.astype(jnp.bfloat16))
            w_hh_dirs.append(w_hh.T.astype(jnp.bfloat16))
            b_dirs.append(b_ih + b_hh)
        params.append((jnp.stack(w_ih_dirs),        # (2, d_in, 4H) bf16
                       jnp.stack(w_hh_dirs),        # (2, H,    4H) bf16
                       jnp.stack(b_dirs)))          # (2, 4H)       f32
        d_in = 2 * hidden_size
    return params


# ----------------------------------------------------------------------------
# StackedBRNN forward (eval mode: dropout is a no-op).
# ----------------------------------------------------------------------------
def stacked_brnn_forward(x_btd, x_mask_bt, params, *, t_chunk=16,
                         concat_layers=False):
    # x: (B, T, D) batch-first -> time-major (T, B, D)
    x = jnp.transpose(x_btd.astype(jnp.float32), (1, 0, 2))
    # validity: x_mask == 0 means real token
    valid = (x_mask_bt == 0).astype(jnp.float32).T[:, :, None]   # (T, B, 1)

    layer_outs = []
    out = x
    for (w_ih, w_hh, bias) in params:
        out = bilstm_layer(out, valid, w_ih, w_hh, bias, t_chunk=t_chunk)
        layer_outs.append(out)

    final = jnp.concatenate(layer_outs, axis=-1) if concat_layers else out
    # TODO(synk): dropout (training mode) intentionally omitted — eval no-op.
    return jnp.transpose(final, (1, 0, 2))                        # (B, T, ·)


# ----------------------------------------------------------------------------
# Pure-JAX reference (identical bf16/f32 arithmetic) for correctness check.
# ----------------------------------------------------------------------------
def _stacked_brnn_reference(x_btd, x_mask_bt, params):
    x = jnp.transpose(x_btd.astype(jnp.float32), (1, 0, 2))       # (T, B, D)
    valid = (x_mask_bt == 0).astype(jnp.float32).T[:, :, None]    # (T, B, 1)
    out = x
    for (w_ih, w_hh, bias) in params:
        T, B, _ = out.shape
        H = w_hh.shape[1]
        dir_outs = []
        for d in range(2):
            xg = jnp.einsum("tbd,dg->tbg", out.astype(jnp.bfloat16), w_ih[d],
                            preferred_element_type=jnp.float32) + bias[d]
            h = jnp.zeros((B, H), jnp.float32)
            c = jnp.zeros((B, H), jnp.float32)
            outs = [None] * T
            order = range(T) if d == 0 else range(T - 1, -1, -1)
            for t in order:
                gates = xg[t] + jnp.dot(h.astype(jnp.bfloat16), w_hh[d],
                                        preferred_element_type=jnp.float32)
                i_g = _sigmoid(gates[:, 0 * H:1 * H])
                f_g = _sigmoid(gates[:, 1 * H:2 * H])
                g_g = jnp.tanh(gates[:, 2 * H:3 * H])
                o_g = _sigmoid(gates[:, 3 * H:4 * H])
                c_new = f_g * c + i_g * g_g
                h_new = o_g * jnp.tanh(c_new)
                v = valid[t]
                outs[t] = h_new * v
                keep = v > 0.0
                h = jnp.where(keep, h_new, h)
                c = jnp.where(keep, c_new, c)
            dir_outs.append(jnp.stack(outs, axis=0))
        out = jnp.concatenate(dir_outs, axis=-1)
    return jnp.transpose(out, (1, 0, 2))


if __name__ == "__main__":
    B, T, D, H, L = 2, 8, 16, 32, 2

    key = jax.random.PRNGKey(0)
    kx, kp = jax.random.split(key)

    x = jax.random.normal(kx, (B, T, D), jnp.float32)
    # 1 = padding; sequence 0 is full length, sequence 1 has length 5
    x_mask = jnp.array(
        [[0, 0, 0, 0, 0, 0, 0, 0],
         [0, 0, 0, 0, 0, 1, 1, 1]], dtype=jnp.int32)

    params = init_stacked_brnn_params(kp, D, H, L)

    # t_chunk=4 -> 2 chunks per direction: exercises the state carry across
    # grid steps and the backward chunk-reversed index maps.
    fwd = jax.jit(functools.partial(stacked_brnn_forward, t_chunk=4))
    out = jax.block_until_ready(fwd(x, x_mask, params))

    assert out.shape == (B, T, 2 * H), out.shape
    # padded positions must be exactly zero (pad_packed_sequence semantics)
    assert jnp.all(out[1, 5:, :] == 0.0)

    # correctness vs pure-JAX reference with matching precision
    ref = _stacked_brnn_reference(x, x_mask, params)
    max_err = float(jnp.max(jnp.abs(out - ref)))
    assert max_err < 3e-2, f"max abs error vs reference: {max_err}"

    print("KERNEL_OK")
</pallas_src>

<mosaic_0001>
module attributes {stable_mosaic.version = 11 : i64} {
  func.func @_bilstm_kernel(%arg0: i32, %arg1: i32, %arg2: memref<1x4x2x128xf32, #tpu.memory_space<vmem>>, %arg3: memref<4x2x1xf32, #tpu.memory_space<vmem>>, %arg4: memref<1x32x128xbf16, #tpu.memory_space<vmem>>, %arg5: memref<1x4x2x32xf32, #tpu.memory_space<vmem>>, %arg6: memref<2x32xf32, #tpu.memory_space<vmem>>, %arg7: memref<2x32xf32, #tpu.memory_space<vmem>>) attributes {dimension_semantics = [#tpu.dimension_semantics<parallel>, #tpu.dimension_semantics<arbitrary>], iteration_bounds = array<i64: 2, 2>, scalar_prefetch = 0 : i64, scratch_operands = 2 : i64, tpu.core_type = #tpu.core_type<tc>, window_params = [{transform_indices = @transform_0, window_bounds = array<i64: 1, 4, 2, 128>}, {transform_indices = @transform_1, window_bounds = array<i64: 4, 2, 1>}, {transform_indices = @transform_2, window_bounds = array<i64: 1, 32, 128>}, {transform_indices = @transform_3, window_bounds = array<i64: 1, 4, 2, 32>}]} {
    %c0_i32 = arith.constant 0 : i32
    %0 = arith.cmpi eq, %arg1, %c0_i32 : i32
    %1 = arith.extui %0 : i1 to i32
    %c0_i32_0 = arith.constant 0 : i32
    %2 = arith.cmpi ne, %1, %c0_i32_0 : i32
    scf.if %2 {
      %cst = arith.constant 0.000000e+00 : f32
      %11 = vector.broadcast %cst : f32 to vector<2x32xf32>
      %c0_6 = arith.constant 0 : index
      %c0_7 = arith.constant 0 : index
      %12 = vector.load %arg6[%c0_6, %c0_7] : memref<2x32xf32, #tpu.memory_space<vmem>>, vector<2x32xf32>
      tpu.vector_store %arg6[%c0_6, %c0_7], %11 {strides = array<i32>} : memref<2x32xf32, #tpu.memory_space<vmem>>, vector<2x32xf32>,
      %cst_8 = arith.constant 0.000000e+00 : f32
      %13 = vector.broadcast %cst_8 : f32 to vector<2x32xf32>
      %c0_9 = arith.constant 0 : index
      %c0_10 = arith.constant 0 : index
      %14 = vector.load %arg7[%c0_9, %c0_10] : memref<2x32xf32, #tpu.memory_space<vmem>>, vector<2x32xf32>
      tpu.vector_store %arg7[%c0_9, %c0_10], %13 {strides = array<i32>} : memref<2x32xf32, #tpu.memory_space<vmem>>, vector<2x32xf32>,
    } else {
    }
    %c0 = arith.constant 0 : index
    %c0_1 = arith.constant 0 : index
    %c0_2 = arith.constant 0 : index
    %3 = vector.load %arg4[%c0, %c0_1, %c0_2] : memref<1x32x128xbf16, #tpu.memory_space<vmem>>, vector<1x32x128xbf16>
    %4 = vector.shape_cast %3 : vector<1x32x128xbf16> to vector<32x128xbf16>
    %c0_i32_3 = arith.constant 0 : i32
    %5 = arith.cmpi eq, %arg0, %c0_i32_3 : i32
    %6 = arith.extui %5 : i1 to i32
    %c0_i32_4 = arith.constant 0 : i32
    %7 = arith.cmpi ne, %6, %c0_i32_4 : i32
    scf.if %7 {
      %c0_6 = arith.constant 0 : index
      %c0_7 = arith.constant 0 : index
      %11 = vector.load %arg6[%c0_6, %c0_7] : memref<2x32xf32, #tpu.memory_space<vmem>>, vector<2x32xf32>
      %c0_8 = arith.constant 0 : index
      %c0_9 = arith.constant 0 : index
      %12 = vector.load %arg7[%c0_8, %c0_9] : memref<2x32xf32, #tpu.memory_space<vmem>>, vector<2x32xf32>
      %c0_10 = arith.constant 0 : index
      %c0_11 = arith.constant 0 : index
      %c0_12 = arith.constant 0 : index
      %c0_13 = arith.constant 0 : index
      %13 = vector.load %arg2[%c0_10, %c0_11, %c0_12, %c0_13] : memref<1x4x2x128xf32, #tpu.memory_space<vmem>>, vector<1x1x2x128xf32>
      %14 = vector.shape_cast %13 : vector<1x1x2x128xf32> to vector<2x128xf32>
      %c0_14 = arith.constant 0 : index
      %c0_15 = arith.constant 0 : index
      %c0_16 = arith.constant 0 : index
      %15 = vector.load %arg3[%c0_14, %c0_15, %c0_16] : memref<4x2x1xf32, #tpu.memory_space<vmem>>, vector<1x2x1xf32>
      %16 = vector.shape_cast %15 : vector<1x2x1xf32> to vector<2x1xf32>
      %17 = arith.truncf %11 : vector<2x32xf32> to vector<2x32xbf16>
      %cst = arith.constant dense<0.000000e+00> : vector<2x128xf32>
      %18 = tpu.matmul %17, %4, %cst {dimension_numbers = #tpu.dot_dimension_numbers<[1], [0], [0], [1], [0, 0, 1, 1], [], []>} : vector<2x32xbf16>, vector<32x128xbf16>, vector<2x128xf32> -> vector<2x128xf32>
      %19 = arith.addf %14, %18 : vector<2x128xf32>
      %20 = vector.extract_strided_slice %19 {offsets = [0, 0], sizes = [2, 32], strides = [1, 1]} : vector<2x128xf32> to vector<2x32xf32>
      %cst_17 = arith.constant 5.000000e-01 : f32
      %21 = vector.broadcast %cst_17 : f32 to vector<2x32xf32>
      %22 = arith.mulf %21, %20 : vector<2x32xf32>
      %23 = math.tanh %22 : vector<2x32xf32>
      %cst_18 = arith.constant 5.000000e-01 : f32
      %24 = vector.broadcast %cst_18 : f32 to vector<2x32xf32>
      %25 = arith.mulf %24, %23 : vector<2x32xf32>
      %cst_19 = arith.constant 5.000000e-01 : f32
      %26 = vector.broadcast %cst_19 : f32 to vector<2x32xf32>
      %27 = arith.addf %25, %26 : vector<2x32xf32>
      %28 = vector.extract_strided_slice %19 {offsets = [0, 32], sizes = [2, 32], strides = [1, 1]} : vector<2x128xf32> to vector<2x32xf32>
      %cst_20 = arith.constant 5.000000e-01 : f32
      %29 = vector.broadcast %cst_20 : f32 to vector<2x32xf32>
      %30 = arith.mulf %29, %28 : vector<2x32xf32>
      %31 = math.tanh %30 : vector<2x32xf32>
      %cst_21 = arith.constant 5.000000e-01 : f32
      %32 = vector.broadcast %cst_21 : f32 to vector<2x32xf32>
      %33 = arith.mulf %32, %31 : vector<2x32xf32>
      %cst_22 = arith.constant 5.000000e-01 : f32
      %34 = vector.broadcast %cst_22 : f32 to vector<2x32xf32>
      %35 = arith.addf %33, %34 : vector<2x32xf32>
      %36 = vector.extract_strided_slice %19 {offsets = [0, 64], sizes = [2, 32], strides = [1, 1]} : vector<2x128xf32> to vector<2x32xf32>
      %37 = math.tanh %36 : vector<2x32xf32>
      %38 = vector.extract_strided_slice %19 {offsets = [0, 96], sizes = [2, 32], strides = [1, 1]} : vector<2x128xf32> to vector<2x32xf32>
      %cst_23 = arith.constant 5.000000e-01 : f32
      %39 = vector.broadcast %cst_23 : f32 to vector<2x32xf32>
      %40 = arith.mulf %39, %38 : vector<2x32xf32>
      %41 = math.tanh %40 : vector<2x32xf32>
      %cst_24 = arith.constant 5.000000e-01 : f32
      %42 = vector.broadcast %cst_24 : f32 to vector<2x32xf32>
      %43 = arith.mulf %42, %41 : vector<2x32xf32>
      %cst_25 = arith.constant 5.000000e-01 : f32
      %44 = vector.broadcast %cst_25 : f32 to vector<2x32xf32>
      %45 = arith.addf %43, %44 : vector<2x32xf32>
      %46 = arith.mulf %35, %12 : vector<2x32xf32>
      %47 = arith.mulf %27, %37 : vector<2x32xf32>
      %48 = arith.addf %46, %47 : vector<2x32xf32>
      %49 = math.tanh %48 : vector<2x32xf32>
      %50 = arith.mulf %45, %49 : vector<2x32xf32>
      %51 = vector.broadcast %16 : vector<2x1xf32> to vector<2x32xf32>
      %52 = arith.mulf %50, %51 : vector<2x32xf32>
      %c0_26 = arith.constant 0 : index
      %c0_27 = arith.constant 0 : index
      %c0_28 = arith.constant 0 : index
      %c0_29 = arith.constant 0 : index
      %53 = vector.load %arg5[%c0_26, %c0_27, %c0_28, %c0_29] : memref<1x4x2x32xf32, #tpu.memory_space<vmem>>, vector<1x1x2x32xf32>
      %54 = vector.shape_cast %53 : vector<1x1x2x32xf32> to vector<2x32xf32>
      %55 = vector.shape_cast %52 : vector<2x32xf32> to vector<1x1x2x32xf32>
      tpu.vector_store %arg5[%c0_26, %c0_27, %c0_28, %c0_29], %55 {strides = array<i32>} : memref<1x4x2x32xf32, #tpu.memory_space<vmem>>, vector<1x1x2x32xf32>,
      %cst_30 = arith.constant 0.000000e+00 : f32
      %56 = vector.broadcast %cst_30 : f32 to vector<2x1xf32>
      %57 = arith.cmpf ogt, %16, %56 : vector<2x1xf32>
      %58 = vector.shape_cast %57 : vector<2x1xi1> to vector<2x1xi1>
      %59 = vector.broadcast %58 : vector<2x1xi1> to vector<2x32xi1>
      %60 = arith.select %59, %50, %11 : vector<2x32xi1>, vector<2x32xf32>
      %61 = vector.shape_cast %57 : vector<2x1xi1> to vector<2x1xi1>
      %62 = vector.broadcast %61 : vector<2x1xi1> to vector<2x32xi1>
      %63 = arith.select %62, %48, %12 : vector<2x32xi1>, vector<2x32xf32>
      %c0_31 = arith.constant 0 : index
      %c1 = arith.constant 1 : index
      %c0_32 = arith.constant 0 : index
      %c0_33 = arith.constant 0 : index
      %64 = vector.load %arg2[%c0_31, %c1, %c0_32, %c0_33] : memref<1x4x2x128xf32, #tpu.memory_space<vmem>>, vector<1x1x2x128xf32>
      %65 = vector.shape_cast %64 : vector<1x1x2x128xf32> to vector<2x128xf32>
      %c1_34 = arith.constant 1 : index
      %c0_35 = arith.constant 0 : index
      %c0_36 = arith.constant 0 : index
      %66 = vector.load %arg3[%c1_34, %c0_35, %c0_36] : memref<4x2x1xf32, #tpu.memory_space<vmem>>, vector<1x2x1xf32>
      %67 = vector.shape_cast %66 : vector<1x2x1xf32> to vector<2x1xf32>
      %68 = arith.truncf %60 : vector<2x32xf32> to vector<2x32xbf16>
      %cst_37 = arith.constant dense<0.000000e+00> : vector<2x128xf32>
      %69 = tpu.matmul %68, %4, %cst_37 {dimension_numbers = #tpu.dot_dimension_numbers<[1], [0], [0], [1], [0, 0, 1, 1], [], []>} : vector<2x32xbf16>, vector<32x128xbf16>, vector<2x128xf32> -> vector<2x128xf32>
      %70 = arith.addf %65, %69 : vector<2x128xf32>
      %71 = vector.extract_strided_slice %70 {offsets = [0, 0], sizes = [2, 32], strides = [1, 1]} : vector<2x128xf32> to vector<2x32xf32>
      %cst_38 = arith.constant 5.000000e-01 : f32
      %72 = vector.broadcast %cst_38 : f32 to vector<2x32xf32>
      %73 = arith.mulf %72, %71 : vector<2x32xf32>
      %74 = math.tanh %73 : vector<2x32xf32>
      %cst_39 = arith.constant 5.000000e-01 : f32
      %75 = vector.broadcast %cst_39 : f32 to vector<2x32xf32>
      %76 = arith.mulf %75, %74 : vector<2x32xf32>
      %cst_40 = arith.constant 5.000000e-01 : f32
      %77 = vector.broadcast %cst_40 : f32 to vector<2x32xf32>
      %78 = arith.addf %76, %77 : vector<2x32xf32>
      %79 = vector.extract_strided_slice %70 {offsets = [0, 32], sizes = [2, 32], strides = [1, 1]} : vector<2x128xf32> to vector<2x32xf32>
      %cst_41 = arith.constant 5.000000e-01 : f32
      %80 = vector.broadcast %cst_41 : f32 to vector<2x32xf32>
      %81 = arith.mulf %80, %79 : vector<2x32xf32>
      %82 = math.tanh %81 : vector<2x32xf32>
      %cst_42 = arith.constant 5.000000e-01 : f32
      %83 = vector.broadcast %cst_42 : f32 to vector<2x32xf32>
      %84 = arith.mulf %83, %82 : vector<2x32xf32>
      %cst_43 = arith.constant 5.000000e-01 : f32
      %85 = vector.broadcast %cst_43 : f32 to vector<2x32xf32>
      %86 = arith.addf %84, %85 : vector<2x32xf32>
      %87 = vector.extract_strided_slice %70 {offsets = [0, 64], sizes = [2, 32], strides = [1, 1]} : vector<2x128xf32> to vector<2x32xf32>
      %88 = math.tanh %87 : vector<2x32xf32>
      %89 = vector.extract_strided_slice %70 {offsets = [0, 96], sizes = [2, 32], strides = [1, 1]} : vector<2x128xf32> to vector<2x32xf32>
      %cst_44 = arith.constant 5.000000e-01 : f32
      %90 = vector.broadcast %cst_44 : f32 to vector<2x32xf32>
      %91 = arith.mulf %90, %89 : vector<2x32xf32>
      %92 = math.tanh %91 : vector<2x32xf32>
      %cst_45 = arith.constant 5.000000e-01 : f32
      %93 = vector.broadcast %cst_45 : f32 to vector<2x32xf32>
      %94 = arith.mulf %93, %92 : vector<2x32xf32>
      %cst_46 = arith.constant 5.000000e-01 : f32
      %95 = vector.broadcast %cst_46 : f32 to vector<2x32xf32>
      %96 = arith.addf %94, %95 : vector<2x32xf32>
      %97 = arith.mulf %86, %63 : vector<2x32xf32>
      %98 = arith.mulf %78, %88 : vector<2x32xf32>
      %99 = arith.addf %97, %98 : vector<2x32xf32>
      %100 = math.tanh %99 : vector<2x32xf32>
      %101 = arith.mulf %96, %100 : vector<2x32xf32>
      %102 = vector.broadcast %67 : vector<2x1xf32> to vector<2x32xf32>
      %103 = arith.mulf %101, %102 : vector<2x32xf32>
      %c0_47 = arith.constant 0 : index
      %c1_48 = arith.constant 1 : index
      %c0_49 = arith.constant 0 : index
      %c0_50 = arith.constant 0 : index
      %104 = vector.load %arg5[%c0_47, %c1_48, %c0_49, %c0_50] : memref<1x4x2x32xf32, #tpu.memory_space<vmem>>, vector<1x1x2x32xf32>
      %105 = vector.shape_cast %104 : vector<1x1x2x32xf32> to vector<2x32xf32>
      %106 = vector.shape_cast %103 : vector<2x32xf32> to vector<1x1x2x32xf32>
      tpu.vector_store %arg5[%c0_47, %c1_48, %c0_49, %c0_50], %106 {strides = array<i32>} : memref<1x4x2x32xf32, #tpu.memory_space<vmem>>, vector<1x1x2x32xf32>,
      %cst_51 = arith.constant 0.000000e+00 : f32
      %107 = vector.broadcast %cst_51 : f32 to vector<2x1xf32>
      %108 = arith.cmpf ogt, %67, %107 : vector<2x1xf32>
      %109 = vector.shape_cast %108 : vector<2x1xi1> to vector<2x1xi1>
      %110 = vector.broadcast %109 : vector<2x1xi1> to vector<2x32xi1>
      %111 = arith.select %110, %101, %60 : vector<2x32xi1>, vector<2x32xf32>
      %112 = vector.shape_cast %108 : vector<2x1xi1> to vector<2x1xi1>
      %113 = vector.broadcast %112 : vector<2x1xi1> to vector<2x32xi1>
      %114 = arith.select %113, %99, %63 : vector<2x32xi1>, vector<2x32xf32>
      %c0_52 = arith.constant 0 : index
      %c2 = arith.constant 2 : index
      %c0_53 = arith.constant 0 : index
      %c0_54 = arith.constant 0 : index
      %115 = vector.load %arg2[%c0_52, %c2, %c0_53, %c0_54] : memref<1x4x2x128xf32, #tpu.memory_space<vmem>>, vector<1x1x2x128xf32>
      %116 = vector.shape_cast %115 : vector<1x1x2x128xf32> to vector<2x128xf32>
      %c2_55 = arith.constant 2 : index
      %c0_56 = arith.constant 0 : index
      %c0_57 = arith.constant 0 : index
      %117 = vector.load %arg3[%c2_55, %c0_56, %c0_57] : memref<4x2x1xf32, #tpu.memory_space<vmem>>, vector<1x2x1xf32>
      %118 = vector.shape_cast %117 : vector<1x2x1xf32> to vector<2x1xf32>
      %119 = arith.truncf %111 : vector<2x32xf32> to vector<2x32xbf16>
      %cst_58 = arith.constant dense<0.000000e+00> : vector<2x128xf32>
      %120 = tpu.matmul %119, %4, %cst_58 {dimension_numbers = #tpu.dot_dimension_numbers<[1], [0], [0], [1], [0, 0, 1, 1], [], []>} : vector<2x32xbf16>, vector<32x128xbf16>, vector<2x128xf32> -> vector<2x128xf32>
      %121 = arith.addf %116, %120 : vector<2x128xf32>
      %122 = vector.extract_strided_slice %121 {offsets = [0, 0], sizes = [2, 32], strides = [1, 1]} : vector<2x128xf32> to vector<2x32xf32>
      %cst_59 = arith.constant 5.000000e-01 : f32
      %123 = vector.broadcast %cst_59 : f32 to vector<2x32xf32>
      %124 = arith.mulf %123, %122 : vector<2x32xf32>
      %125 = math.tanh %124 : vector<2x32xf32>
      %cst_60 = arith.constant 5.000000e-01 : f32
      %126 = vector.broadcast %cst_60 : f32 to vector<2x32xf32>
      %127 = arith.mulf %126, %125 : vector<2x32xf32>
      %cst_61 = arith.constant 5.000000e-01 : f32
      %128 = vector.broadcast %cst_61 : f32 to vector<2x32xf32>
      %129 = arith.addf %127, %128 : vector<2x32xf32>
      %130 = vector.extract_strided_slice %121 {offsets = [0, 32], sizes = [2, 32], strides = [1, 1]} : vector<2x128xf32> to vector<2x32xf32>
      %cst_62 = arith.constant 5.000000e-01 : f32
      %131 = vector.broadcast %cst_62 : f32 to vector<2x32xf32>
      %132 = arith.mulf %131, %130 : vector<2x32xf32>
      %133 = math.tanh %132 : vector<2x32xf32>
      %cst_63 = arith.constant 5.000000e-01 : f32
      %134 = vector.broadcast %cst_63 : f32 to vector<2x32xf32>
      %135 = arith.mulf %134, %133 : vector<2x32xf32>
      %cst_64 = arith.constant 5.000000e-01 : f32
      %136 = vector.broadcast %cst_64 : f32 to vector<2x32xf32>
      %137 = arith.addf %135, %136 : vector<2x32xf32>
      %138 = vector.extract_strided_slice %121 {offsets = [0, 64], sizes = [2, 32], strides = [1, 1]} : vector<2x128xf32> to vector<2x32xf32>
      %139 = math.tanh %138 : vector<2x32xf32>
      %140 = vector.extract_strided_slice %121 {offsets = [0, 96], sizes = [2, 32], strides = [1, 1]} : vector<2x128xf32> to vector<2x32xf32>
      %cst_65 = arith.constant 5.000000e-01 : f32
      %141 = vector.broadcast %cst_65 : f32 to vector<2x32xf32>
      %142 = arith.mulf %141, %140 : vector<2x32xf32>
      %143 = math.tanh %142 : vector<2x32xf32>
      %cst_66 = arith.constant 5.000000e-01 : f32
      %144 = vector.broadcast %cst_66 : f32 to vector<2x32xf32>
      %145 = arith.mulf %144, %143 : vector<2x32xf32>
      %cst_67 = arith.constant 5.000000e-01 : f32
      %146 = vector.broadcast %cst_67 : f32 to vector<2x32xf32>
      %147 = arith.addf %145, %146 : vector<2x32xf32>
      %148 = arith.mulf %137, %114 : vector<2x32xf32>
      %149 = arith.mulf %129, %139 : vector<2x32xf32>
      %150 = arith.addf %148, %149 : vector<2x32xf32>
      %151 = math.tanh %150 : vector<2x32xf32>
      %152 = arith.mulf %147, %151 : vector<2x32xf32>
      %153 = vector.broadcast %118 : vector<2x1xf32> to vector<2x32xf32>
      %154 = arith.mulf %152, %153 : vector<2x32xf32>
      %c0_68 = arith.constant 0 : index
      %c2_69 = arith.constant 2 : index
      %c0_70 = arith.constant 0 : index
      %c0_71 = arith.constant 0 : index
      %155 = vector.load %arg5[%c0_68, %c2_69, %c0_70, %c0_71] : memref<1x4x2x32xf32, #tpu.memory_space<vmem>>, vector<1x1x2x32xf32>
      %156 = vector.shape_cast %155 : vector<1x1x2x32xf32> to vector<2x32xf32>
      %157 = vector.shape_cast %154 : vector<2x32xf32> to vector<1x1x2x32xf32>
      tpu.vector_store %arg5[%c0_68, %c2_69, %c0_70, %c0_71], %157 {strides = array<i32>} : memref<1x4x2x32xf32, #tpu.memory_space<vmem>>, vector<1x1x2x32xf32>,
      %cst_72 = arith.constant 0.000000e+00 : f32
      %158 = vector.broadcast %cst_72 : f32 to vector<2x1xf32>
      %159 = arith.cmpf ogt, %118, %158 : vector<2x1xf32>
      %160 = vector.shape_cast %159 : vector<2x1xi1> to vector<2x1xi1>
      %161 = vector.broadcast %160 : vector<2x1xi1> to vector<2x32xi1>
      %162 = arith.select %161, %152, %111 : vector<2x32xi1>, vector<2x32xf32>
      %163 = vector.shape_cast %159 : vector<2x1xi1> to vector<2x1xi1>
      %164 = vector.broadcast %163 : vector<2x1xi1> to vector<2x32xi1>
      %165 = arith.select %164, %150, %114 : vector<2x32xi1>, vector<2x32xf32>
      %c0_73 = arith.constant 0 : index
      %c3 = arith.constant 3 : index
      %c0_74 = arith.constant 0 : index
      %c0_75 = arith.constant 0 : index
      %166 = vector.load %arg2[%c0_73, %c3, %c0_74, %c0_75] : memref<1x4x2x128xf32, #tpu.memory_space<vmem>>, vector<1x1x2x128xf32>
      %167 = vector.shape_cast %166 : vector<1x1x2x128xf32> to vector<2x128xf32>
      %c3_76 = arith.constant 3 : index
      %c0_77 = arith.constant 0 : index
      %c0_78 = arith.constant 0 : index
      %168 = vector.load %arg3[%c3_76, %c0_77, %c0_78] : memref<4x2x1xf32, #tpu.memory_space<vmem>>, vector<1x2x1xf32>
      %169 = vector.shape_cast %168 : vector<1x2x1xf32> to vector<2x1xf32>
      %170 = arith.truncf %162 : vector<2x32xf32> to vector<2x32xbf16>
      %cst_79 = arith.constant dense<0.000000e+00> : vector<2x128xf32>
      %171 = tpu.matmul %170, %4, %cst_79 {dimension_numbers = #tpu.dot_dimension_numbers<[1], [0], [0], [1], [0, 0, 1, 1], [], []>} : vector<2x32xbf16>, vector<32x128xbf16>, vector<2x128xf32> -> vector<2x128xf32>
      %172 = arith.addf %167, %171 : vector<2x128xf32>
      %173 = vector.extract_strided_slice %172 {offsets = [0, 0], sizes = [2, 32], strides = [1, 1]} : vector<2x128xf32> to vector<2x32xf32>
      %cst_80 = arith.constant 5.000000e-01 : f32
      %174 = vector.broadcast %cst_80 : f32 to vector<2x32xf32>
      %175 = arith.mulf %174, %173 : vector<2x32xf32>
      %176 = math.tanh %175 : vector<2x32xf32>
      %cst_81 = arith.constant 5.000000e-01 : f32
      %177 = vector.broadcast %cst_81 : f32 to vector<2x32xf32>
      %178 = arith.mulf %177, %176 : vector<2x32xf32>
      %cst_82 = arith.constant 5.000000e-01 : f32
      %179 = vector.broadcast %cst_82 : f32 to vector<2x32xf32>
      %180 = arith.addf %178, %179 : vector<2x32xf32>
      %181 = vector.extract_strided_slice %172 {offsets = [0, 32], sizes = [2, 32], strides = [1, 1]} : vector<2x128xf32> to vector<2x32xf32>
      %cst_83 = arith.constant 5.000000e-01 : f32
      %182 = vector.broadcast %cst_83 : f32 to vector<2x32xf32>
      %183 = arith.mulf %182, %181 : vector<2x32xf32>
      %184 = math.tanh %183 : vector<2x32xf32>
      %cst_84 = arith.constant 5.000000e-01 : f32
      %185 = vector.broadcast %cst_84 : f32 to vector<2x32xf32>
      %186 = arith.mulf %185, %184 : vector<2x32xf32>
      %cst_85 = arith.constant 5.000000e-01 : f32
      %187 = vector.broadcast %cst_85 : f32 to vector<2x32xf32>
      %188 = arith.addf %186, %187 : vector<2x32xf32>
      %189 = vector.extract_strided_slice %172 {offsets = [0, 64], sizes = [2, 32], strides = [1, 1]} : vector<2x128xf32> to vector<2x32xf32>
      %190 = math.tanh %189 : vector<2x32xf32>
      %191 = vector.extract_strided_slice %172 {offsets = [0, 96], sizes = [2, 32], strides = [1, 1]} : vector<2x128xf32> to vector<2x32xf32>
      %cst_86 = arith.constant 5.000000e-01 : f32
      %192 = vector.broadcast %cst_86 : f32 to vector<2x32xf32>
      %193 = arith.mulf %192, %191 : vector<2x32xf32>
      %194 = math.tanh %193 : vector<2x32xf32>
      %cst_87 = arith.constant 5.000000e-01 : f32
      %195 = vector.broadcast %cst_87 : f32 to vector<2x32xf32>
      %196 = arith.mulf %195, %194 : vector<2x32xf32>
      %cst_88 = arith.constant 5.000000e-01 : f32
      %197 = vector.broadcast %cst_88 : f32 to vector<2x32xf32>
      %198 = arith.addf %196, %197 : vector<2x32xf32>
      %199 = arith.mulf %188, %165 : vector<2x32xf32>
      %200 = arith.mulf %180, %190 : vector<2x32xf32>
      %201 = arith.addf %199, %200 : vector<2x32xf32>
      %202 = math.tanh %201 : vector<2x32xf32>
      %203 = arith.mulf %198, %202 : vector<2x32xf32>
      %204 = vector.broadcast %169 : vector<2x1xf32> to vector<2x32xf32>
      %205 = arith.mulf %203, %204 : vector<2x32xf32>
      %c0_89 = arith.constant 0 : index
      %c3_90 = arith.constant 3 : index
      %c0_91 = arith.constant 0 : index
      %c0_92 = arith.constant 0 : index
      %206 = vector.load %arg5[%c0_89, %c3_90, %c0_91, %c0_92] : memref<1x4x2x32xf32, #tpu.memory_space<vmem>>, vector<1x1x2x32xf32>
      %207 = vector.shape_cast %206 : vector<1x1x2x32xf32> to vector<2x32xf32>
      %208 = vector.shape_cast %205 : vector<2x32xf32> to vector<1x1x2x32xf32>
      tpu.vector_store %arg5[%c0_89, %c3_90, %c0_91, %c0_92], %208 {strides = array<i32>} : memref<1x4x2x32xf32, #tpu.memory_space<vmem>>, vector<1x1x2x32xf32>,
      %cst_93 = arith.constant 0.000000e+00 : f32
      %209 = vector.broadcast %cst_93 : f32 to vector<2x1xf32>
      %210 = arith.cmpf ogt, %169, %209 : vector<2x1xf32>
      %211 = vector.shape_cast %210 : vector<2x1xi1> to vector<2x1xi1>
      %212 = vector.broadcast %211 : vector<2x1xi1> to vector<2x32xi1>
      %213 = arith.select %212, %203, %162 : vector<2x32xi1>, vector<2x32xf32>
      %214 = vector.shape_cast %210 : vector<2x1xi1> to vector<2x1xi1>
      %215 = vector.broadcast %214 : vector<2x1xi1> to vector<2x32xi1>
      %216 = arith.select %215, %201, %165 : vector<2x32xi1>, vector<2x32xf32>
      %c0_94 = arith.constant 0 : index
      %c0_95 = arith.constant 0 : index
      %217 = vector.load %arg6[%c0_94, %c0_95] : memref<2x32xf32, #tpu.memory_space<vmem>>, vector<2x32xf32>
      tpu.vector_store %arg6[%c0_94, %c0_95], %213 {strides = array<i32>} : memref<2x32xf32, #tpu.memory_space<vmem>>, vector<2x32xf32>,
      %c0_96 = arith.constant 0 : index
      %c0_97 = arith.constant 0 : index
      %218 = vector.load %arg7[%c0_96, %c0_97] : memref<2x32xf32, #tpu.memory_space<vmem>>, vector<2x32xf32>
      tpu.vector_store %arg7[%c0_96, %c0_97], %216 {strides = array<i32>} : memref<2x32xf32, #tpu.memory_space<vmem>>, vector<2x32xf32>,
    } else {
    }
    %c1_i32 = arith.constant 1 : i32
    %8 = arith.cmpi eq, %arg0, %c1_i32 : i32
    %9 = arith.extui %8 : i1 to i32
    %c0_i32_5 = arith.constant 0 : i32
    %10 = arith.cmpi ne, %9, %c0_i32_5 : i32
    scf.if %10 {
      %c0_6 = arith.constant 0 : index
      %c0_7 = arith.constant 0 : index
      %11 = vector.load %arg6[%c0_6, %c0_7] : memref<2x32xf32, #tpu.memory_space<vmem>>, vector<2x32xf32>
      %c0_8 = arith.constant 0 : index
      %c0_9 = arith.constant 0 : index
      %12 = vector.load %arg7[%c0_8, %c0_9] : memref<2x32xf32, #tpu.memory_space<vmem>>, vector<2x32xf32>
      %c0_10 = arith.constant 0 : index
      %c3 = arith.constant 3 : index
      %c0_11 = arith.constant 0 : index
      %c0_12 = arith.constant 0 : index
      %13 = vector.load %arg2[%c0_10, %c3, %c0_11, %c0_12] : memref<1x4x2x128xf32, #tpu.memory_space<vmem>>, vector<1x1x2x128xf32>
      %14 = vector.shape_cast %13 : vector<1x1x2x128xf32> to vector<2x128xf32>
      %c3_13 = arith.constant 3 : index
      %c0_14 = arith.constant 0 : index
      %c0_15 = arith.constant 0 : index
      %15 = vector.load %arg3[%c3_13, %c0_14, %c0_15] : memref<4x2x1xf32, #tpu.memory_space<vmem>>, vector<1x2x1xf32>
      %16 = vector.shape_cast %15 : vector<1x2x1xf32> to vector<2x1xf32>
      %17 = arith.truncf %11 : vector<2x32xf32> to vector<2x32xbf16>
      %cst = arith.constant dense<0.000000e+00> : vector<2x128xf32>
      %18 = tpu.matmul %17, %4, %cst {dimension_numbers = #tpu.dot_dimension_numbers<[1], [0], [0], [1], [0, 0, 1, 1], [], []>} : vector<2x32xbf16>, vector<32x128xbf16>, vector<2x128xf32> -> vector<2x128xf32>
      %19 = arith.addf %14, %18 : vector<2x128xf32>
      %20 = vector.extract_strided_slice %19 {offsets = [0, 0], sizes = [2, 32], strides = [1, 1]} : vector<2x128xf32> to vector<2x32xf32>
      %cst_16 = arith.constant 5.000000e-01 : f32
      %21 = vector.broadcast %cst_16 : f32 to vector<2x32xf32>
      %22 = arith.mulf %21, %20 : vector<2x32xf32>
      %23 = math.tanh %22 : vector<2x32xf32>
      %cst_17 = arith.constant 5.000000e-01 : f32
      %24 = vector.broadcast %cst_17 : f32 to vector<2x32xf32>
      %25 = arith.mulf %24, %23 : vector<2x32xf32>
      %cst_18 = arith.constant 5.000000e-01 : f32
      %26 = vector.broadcast %cst_18 : f32 to vector<2x32xf32>
      %27 = arith.addf %25, %26 : vector<2x32xf32>
      %28 = vector.extract_strided_slice %19 {offsets = [0, 32], sizes = [2, 32], strides = [1, 1]} : vector<2x128xf32> to vector<2x32xf32>
      %cst_19 = arith.constant 5.000000e-01 : f32
      %29 = vector.broadcast %cst_19 : f32 to vector<2x32xf32>
      %30 = arith.mulf %29, %28 : vector<2x32xf32>
      %31 = math.tanh %30 : vector<2x32xf32>
      %cst_20 = arith.constant 5.000000e-01 : f32
      %32 = vector.broadcast %cst_20 : f32 to vector<2x32xf32>
      %33 = arith.mulf %32, %31 : vector<2x32xf32>
      %cst_21 = arith.constant 5.000000e-01 : f32
      %34 = vector.broadcast %cst_21 : f32 to vector<2x32xf32>
      %35 = arith.addf %33, %34 : vector<2x32xf32>
      %36 = vector.extract_strided_slice %19 {offsets = [0, 64], sizes = [2, 32], strides = [1, 1]} : vector<2x128xf32> to vector<2x32xf32>
      %37 = math.tanh %36 : vector<2x32xf32>
      %38 = vector.extract_strided_slice %19 {offsets = [0, 96], sizes = [2, 32], strides = [1, 1]} : vector<2x128xf32> to vector<2x32xf32>
      %cst_22 = arith.constant 5.000000e-01 : f32
      %39 = vector.broadcast %cst_22 : f32 to vector<2x32xf32>
      %40 = arith.mulf %39, %38 : vector<2x32xf32>
      %41 = math.tanh %40 : vector<2x32xf32>
      %cst_23 = arith.constant 5.000000e-01 : f32
      %42 = vector.broadcast %cst_23 : f32 to vector<2x32xf32>
      %43 = arith.mulf %42, %41 : vector<2x32xf32>
      %cst_24 = arith.constant 5.000000e-01 : f32
      %44 = vector.broadcast %cst_24 : f32 to vector<2x32xf32>
      %45 = arith.addf %43, %44 : vector<2x32xf32>
      %46 = arith.mulf %35, %12 : vector<2x32xf32>
      %47 = arith.mulf %27, %37 : vector<2x32xf32>
      %48 = arith.addf %46, %47 : vector<2x32xf32>
      %49 = math.tanh %48 : vector<2x32xf32>
      %50 = arith.mulf %45, %49 : vector<2x32xf32>
      %51 = vector.broadcast %16 : vector<2x1xf32> to vector<2x32xf32>
      %52 = arith.mulf %50, %51 : vector<2x32xf32>
      %c0_25 = arith.constant 0 : index
      %c3_26 = arith.constant 3 : index
      %c0_27 = arith.constant 0 : index
      %c0_28 = arith.constant 0 : index
      %53 = vector.load %arg5[%c0_25, %c3_26, %c0_27, %c0_28] : memref<1x4x2x32xf32, #tpu.memory_space<vmem>>, vector<1x1x2x32xf32>
      %54 = vector.shape_cast %53 : vector<1x1x2x32xf32> to vector<2x32xf32>
      %55 = vector.shape_cast %52 : vector<2x32xf32> to vector<1x1x2x32xf32>
      tpu.vector_store %arg5[%c0_25, %c3_26, %c0_27, %c0_28], %55 {strides = array<i32>} : memref<1x4x2x32xf32, #tpu.memory_space<vmem>>, vector<1x1x2x32xf32>,
      %cst_29 = arith.constant 0.000000e+00 : f32
      %56 = vector.broadcast %cst_29 : f32 to vector<2x1xf32>
      %57 = arith.cmpf ogt, %16, %56 : vector<2x1xf32>
      %58 = vector.shape_cast %57 : vector<2x1xi1> to vector<2x1xi1>
      %59 = vector.broadcast %58 : vector<2x1xi1> to vector<2x32xi1>
      %60 = arith.select %59, %50, %11 : vector<2x32xi1>, vector<2x32xf32>
      %61 = vector.shape_cast %57 : vector<2x1xi1> to vector<2x1xi1>
      %62 = vector.broadcast %61 : vector<2x1xi1> to vector<2x32xi1>
      %63 = arith.select %62, %48, %12 : vector<2x32xi1>, vector<2x32xf32>
      %c0_30 = arith.constant 0 : index
      %c2 = arith.constant 2 : index
      %c0_31 = arith.constant 0 : index
      %c0_32 = arith.constant 0 : index
      %64 = vector.load %arg2[%c0_30, %c2, %c0_31, %c0_32] : memref<1x4x2x128xf32, #tpu.memory_space<vmem>>, vector<1x1x2x128xf32>
      %65 = vector.shape_cast %64 : vector<1x1x2x128xf32> to vector<2x128xf32>
      %c2_33 = arith.constant 2 : index
      %c0_34 = arith.constant 0 : index
      %c0_35 = arith.constant 0 : index
      %66 = vector.load %arg3[%c2_33, %c0_34, %c0_35] : memref<4x2x1xf32, #tpu.memory_space<vmem>>, vector<1x2x1xf32>
      %67 = vector.shape_cast %66 : vector<1x2x1xf32> to vector<2x1xf32>
      %68 = arith.truncf %60 : vector<2x32xf32> to vector<2x32xbf16>
      %cst_36 = arith.constant dense<0.000000e+00> : vector<2x128xf32>
      %69 = tpu.matmul %68, %4, %cst_36 {dimension_numbers = #tpu.dot_dimension_numbers<[1], [0], [0], [1], [0, 0, 1, 1], [], []>} : vector<2x32xbf16>, vector<32x128xbf16>, vector<2x128xf32> -> vector<2x128xf32>
      %70 = arith.addf %65, %69 : vector<2x128xf32>
      %71 = vector.extract_strided_slice %70 {offsets = [0, 0], sizes = [2, 32], strides = [1, 1]} : vector<2x128xf32> to vector<2x32xf32>
      %cst_37 = arith.constant 5.000000e-01 : f32
      %72 = vector.broadcast %cst_37 : f32 to vector<2x32xf32>
      %73 = arith.mulf %72, %71 : vector<2x32xf32>
      %74 = math.tanh %73 : vector<2x32xf32>
      %cst_38 = arith.constant 5.000000e-01 : f32
      %75 = vector.broadcast %cst_38 : f32 to vector<2x32xf32>
      %76 = arith.mulf %75, %74 : vector<2x32xf32>
      %cst_39 = arith.constant 5.000000e-01 : f32
      %77 = vector.broadcast %cst_39 : f32 to vector<2x32xf32>
      %78 = arith.addf %76, %77 : vector<2x32xf32>
      %79 = vector.extract_strided_slice %70 {offsets = [0, 32], sizes = [2, 32], strides = [1, 1]} : vector<2x128xf32> to vector<2x32xf32>
      %cst_40 = arith.constant 5.000000e-01 : f32
      %80 = vector.broadcast %cst_40 : f32 to vector<2x32xf32>
      %81 = arith.mulf %80, %79 : vector<2x32xf32>
      %82 = math.tanh %81 : vector<2x32xf32>
      %cst_41 = arith.constant 5.000000e-01 : f32
      %83 = vector.broadcast %cst_41 : f32 to vector<2x32xf32>
      %84 = arith.mulf %83, %82 : vector<2x32xf32>
      %cst_42 = arith.constant 5.000000e-01 : f32
      %85 = vector.broadcast %cst_42 : f32 to vector<2x32xf32>
      %86 = arith.addf %84, %85 : vector<2x32xf32>
      %87 = vector.extract_strided_slice %70 {offsets = [0, 64], sizes = [2, 32], strides = [1, 1]} : vector<2x128xf32> to vector<2x32xf32>
      %88 = math.tanh %87 : vector<2x32xf32>
      %89 = vector.extract_strided_slice %70 {offsets = [0, 96], sizes = [2, 32], strides = [1, 1]} : vector<2x128xf32> to vector<2x32xf32>
      %cst_43 = arith.constant 5.000000e-01 : f32
      %90 = vector.broadcast %cst_43 : f32 to vector<2x32xf32>
      %91 = arith.mulf %90, %89 : vector<2x32xf32>
      %92 = math.tanh %91 : vector<2x32xf32>
      %cst_44 = arith.constant 5.000000e-01 : f32
      %93 = vector.broadcast %cst_44 : f32 to vector<2x32xf32>
      %94 = arith.mulf %93, %92 : vector<2x32xf32>
      %cst_45 = arith.constant 5.000000e-01 : f32
      %95 = vector.broadcast %cst_45 : f32 to vector<2x32xf32>
      %96 = arith.addf %94, %95 : vector<2x32xf32>
      %97 = arith.mulf %86, %63 : vector<2x32xf32>
      %98 = arith.mulf %78, %88 : vector<2x32xf32>
      %99 = arith.addf %97, %98 : vector<2x32xf32>
      %100 = math.tanh %99 : vector<2x32xf32>
      %101 = arith.mulf %96, %100 : vector<2x32xf32>
      %102 = vector.broadcast %67 : vector<2x1xf32> to vector<2x32xf32>
      %103 = arith.mulf %101, %102 : vector<2x32xf32>
      %c0_46 = arith.constant 0 : index
      %c2_47 = arith.constant 2 : index
      %c0_48 = arith.constant 0 : index
      %c0_49 = arith.constant 0 : index
      %104 = vector.load %arg5[%c0_46, %c2_47, %c0_48, %c0_49] : memref<1x4x2x32xf32, #tpu.memory_space<vmem>>, vector<1x1x2x32xf32>
      %105 = vector.shape_cast %104 : vector<1x1x2x32xf32> to vector<2x32xf32>
      %106 = vector.shape_cast %103 : vector<2x32xf32> to vector<1x1x2x32xf32>
      tpu.vector_store %arg5[%c0_46, %c2_47, %c0_48, %c0_49], %106 {strides = array<i32>} : memref<1x4x2x32xf32, #tpu.memory_space<vmem>>, vector<1x1x2x32xf32>,
      %cst_50 = arith.constant 0.000000e+00 : f32
      %107 = vector.broadcast %cst_50 : f32 to vector<2x1xf32>
      %108 = arith.cmpf ogt, %67, %107 : vector<2x1xf32>
      %109 = vector.shape_cast %108 : vector<2x1xi1> to vector<2x1xi1>
      %110 = vector.broadcast %109 : vector<2x1xi1> to vector<2x32xi1>
      %111 = arith.select %110, %101, %60 : vector<2x32xi1>, vector<2x32xf32>
      %112 = vector.shape_cast %108 : vector<2x1xi1> to vector<2x1xi1>
      %113 = vector.broadcast %112 : vector<2x1xi1> to vector<2x32xi1>
      %114 = arith.select %113, %99, %63 : vector<2x32xi1>, vector<2x32xf32>
      %c0_51 = arith.constant 0 : index
      %c1 = arith.constant 1 : index
      %c0_52 = arith.constant 0 : index
      %c0_53 = arith.constant 0 : index
      %115 = vector.load %arg2[%c0_51, %c1, %c0_52, %c0_53] : memref<1x4x2x128xf32, #tpu.memory_space<vmem>>, vector<1x1x2x128xf32>
      %116 = vector.shape_cast %115 : vector<1x1x2x128xf32> to vector<2x128xf32>
      %c1_54 = arith.constant 1 : index
      %c0_55 = arith.constant 0 : index
      %c0_56 = arith.constant 0 : index
      %117 = vector.load %arg3[%c1_54, %c0_55, %c0_56] : memref<4x2x1xf32, #tpu.memory_space<vmem>>, vector<1x2x1xf32>
      %118 = vector.shape_cast %117 : vector<1x2x1xf32> to vector<2x1xf32>
      %119 = arith.truncf %111 : vector<2x32xf32> to vector<2x32xbf16>
      %cst_57 = arith.constant dense<0.000000e+00> : vector<2x128xf32>
      %120 = tpu.matmul %119, %4, %cst_57 {dimension_numbers = #tpu.dot_dimension_numbers<[1], [0], [0], [1], [0, 0, 1, 1], [], []>} : vector<2x32xbf16>, vector<32x128xbf16>, vector<2x128xf32> -> vector<2x128xf32>
      %121 = arith.addf %116, %120 : vector<2x128xf32>
      %122 = vector.extract_strided_slice %121 {offsets = [0, 0], sizes = [2, 32], strides = [1, 1]} : vector<2x128xf32> to vector<2x32xf32>
      %cst_58 = arith.constant 5.000000e-01 : f32
      %123 = vector.broadcast %cst_58 : f32 to vector<2x32xf32>
      %124 = arith.mulf %123, %122 : vector<2x32xf32>
      %125 = math.tanh %124 : vector<2x32xf32>
      %cst_59 = arith.constant 5.000000e-01 : f32
      %126 = vector.broadcast %cst_59 : f32 to vector<2x32xf32>
      %127 = arith.mulf %126, %125 : vector<2x32xf32>
      %cst_60 = arith.constant 5.000000e-01 : f32
      %128 = vector.broadcast %cst_60 : f32 to vector<2x32xf32>
      %129 = arith.addf %127, %128 : vector<2x32xf32>
      %130 = vector.extract_strided_slice %121 {offsets = [0, 32], sizes = [2, 32], strides = [1, 1]} : vector<2x128xf32> to vector<2x32xf32>
      %cst_61 = arith.constant 5.000000e-01 : f32
      %131 = vector.broadcast %cst_61 : f32 to vector<2x32xf32>
      %132 = arith.mulf %131, %130 : vector<2x32xf32>
      %133 = math.tanh %132 : vector<2x32xf32>
      %cst_62 = arith.constant 5.000000e-01 : f32
      %134 = vector.broadcast %cst_62 : f32 to vector<2x32xf32>
      %135 = arith.mulf %134, %133 : vector<2x32xf32>
      %cst_63 = arith.constant 5.000000e-01 : f32
      %136 = vector.broadcast %cst_63 : f32 to vector<2x32xf32>
      %137 = arith.addf %135, %136 : vector<2x32xf32>
      %138 = vector.extract_strided_slice %121 {offsets = [0, 64], sizes = [2, 32], strides = [1, 1]} : vector<2x128xf32> to vector<2x32xf32>
      %139 = math.tanh %138 : vector<2x32xf32>
      %140 = vector.extract_strided_slice %121 {offsets = [0, 96], sizes = [2, 32], strides = [1, 1]} : vector<2x128xf32> to vector<2x32xf32>
      %cst_64 = arith.constant 5.000000e-01 : f32
      %141 = vector.broadcast %cst_64 : f32 to vector<2x32xf32>
      %142 = arith.mulf %141, %140 : vector<2x32xf32>
      %143 = math.tanh %142 : vector<2x32xf32>
      %cst_65 = arith.constant 5.000000e-01 : f32
      %144 = vector.broadcast %cst_65 : f32 to vector<2x32xf32>
      %145 = arith.mulf %144, %143 : vector<2x32xf32>
      %cst_66 = arith.constant 5.000000e-01 : f32
      %146 = vector.broadcast %cst_66 : f32 to vector<2x32xf32>
      %147 = arith.addf %145, %146 : vector<2x32xf32>
      %148 = arith.mulf %137, %114 : vector<2x32xf32>
      %149 = arith.mulf %129, %139 : vector<2x32xf32>
      %150 = arith.addf %148, %149 : vector<2x32xf32>
      %151 = math.tanh %150 : vector<2x32xf32>
      %152 = arith.mulf %147, %151 : vector<2x32xf32>
      %153 = vector.broadcast %118 : vector<2x1xf32> to vector<2x32xf32>
      %154 = arith.mulf %152, %153 : vector<2x32xf32>
      %c0_67 = arith.constant 0 : index
      %c1_68 = arith.constant 1 : index
      %c0_69 = arith.constant 0 : index
      %c0_70 = arith.constant 0 : index
      %155 = vector.load %arg5[%c0_67, %c1_68, %c0_69, %c0_70] : memref<1x4x2x32xf32, #tpu.memory_space<vmem>>, vector<1x1x2x32xf32>
      %156 = vector.shape_cast %155 : vector<1x1x2x32xf32> to vector<2x32xf32>
      %157 = vector.shape_cast %154 : vector<2x32xf32> to vector<1x1x2x32xf32>
      tpu.vector_store %arg5[%c0_67, %c1_68, %c0_69, %c0_70], %157 {strides = array<i32>} : memref<1x4x2x32xf32, #tpu.memory_space<vmem>>, vector<1x1x2x32xf32>,
      %cst_71 = arith.constant 0.000000e+00 : f32
      %158 = vector.broadcast %cst_71 : f32 to vector<2x1xf32>
      %159 = arith.cmpf ogt, %118, %158 : vector<2x1xf32>
      %160 = vector.shape_cast %159 : vector<2x1xi1> to vector<2x1xi1>
      %161 = vector.broadcast %160 : vector<2x1xi1> to vector<2x32xi1>
      %162 = arith.select %161, %152, %111 : vector<2x32xi1>, vector<2x32xf32>
      %163 = vector.shape_cast %159 : vector<2x1xi1> to vector<2x1xi1>
      %164 = vector.broadcast %163 : vector<2x1xi1> to vector<2x32xi1>
      %165 = arith.select %164, %150, %114 : vector<2x32xi1>, vector<2x32xf32>
      %c0_72 = arith.constant 0 : index
      %c0_73 = arith.constant 0 : index
      %c0_74 = arith.constant 0 : index
      %c0_75 = arith.constant 0 : index
      %166 = vector.load %arg2[%c0_72, %c0_73, %c0_74, %c0_75] : memref<1x4x2x128xf32, #tpu.memory_space<vmem>>, vector<1x1x2x128xf32>
      %167 = vector.shape_cast %166 : vector<1x1x2x128xf32> to vector<2x128xf32>
      %c0_76 = arith.constant 0 : index
      %c0_77 = arith.constant 0 : index
      %c0_78 = arith.constant 0 : index
      %168 = vector.load %arg3[%c0_76, %c0_77, %c0_78] : memref<4x2x1xf32, #tpu.memory_space<vmem>>, vector<1x2x1xf32>
      %169 = vector.shape_cast %168 : vector<1x2x1xf32> to vector<2x1xf32>
      %170 = arith.truncf %162 : vector<2x32xf32> to vector<2x32xbf16>
      %cst_79 = arith.constant dense<0.000000e+00> : vector<2x128xf32>
      %171 = tpu.matmul %170, %4, %cst_79 {dimension_numbers = #tpu.dot_dimension_numbers<[1], [0], [0], [1], [0, 0, 1, 1], [], []>} : vector<2x32xbf16>, vector<32x128xbf16>, vector<2x128xf32> -> vector<2x128xf32>
      %172 = arith.addf %167, %171 : vector<2x128xf32>
      %173 = vector.extract_strided_slice %172 {offsets = [0, 0], sizes = [2, 32], strides = [1, 1]} : vector<2x128xf32> to vector<2x32xf32>
      %cst_80 = arith.constant 5.000000e-01 : f32
      %174 = vector.broadcast %cst_80 : f32 to vector<2x32xf32>
      %175 = arith.mulf %174, %173 : vector<2x32xf32>
      %176 = math.tanh %175 : vector<2x32xf32>
      %cst_81 = arith.constant 5.000000e-01 : f32
      %177 = vector.broadcast %cst_81 : f32 to vector<2x32xf32>
      %178 = arith.mulf %177, %176 : vector<2x32xf32>
      %cst_82 = arith.constant 5.000000e-01 : f32
      %179 = vector.broadcast %cst_82 : f32 to vector<2x32xf32>
      %180 = arith.addf %178, %179 : vector<2x32xf32>
      %181 = vector.extract_strided_slice %172 {offsets = [0, 32], sizes = [2, 32], strides = [1, 1]} : vector<2x128xf32> to vector<2x32xf32>
      %cst_83 = arith.constant 5.000000e-01 : f32
      %182 = vector.broadcast %cst_83 : f32 to vector<2x32xf32>
      %183 = arith.mulf %182, %181 : vector<2x32xf32>
      %184 = math.tanh %183 : vector<2x32xf32>
      %cst_84 = arith.constant 5.000000e-01 : f32
      %185 = vector.broadcast %cst_84 : f32 to vector<2x32xf32>
      %186 = arith.mulf %185, %184 : vector<2x32xf32>
      %cst_85 = arith.constant 5.000000e-01 : f32
      %187 = vector.broadcast %cst_85 : f32 to vector<2x32xf32>
      %188 = arith.addf %186, %187 : vector<2x32xf32>
      %189 = vector.extract_strided_slice %172 {offsets = [0, 64], sizes = [2, 32], strides = [1, 1]} : vector<2x128xf32> to vector<2x32xf32>
      %190 = math.tanh %189 : vector<2x32xf32>
      %191 = vector.extract_strided_slice %172 {offsets = [0, 96], sizes = [2, 32], strides = [1, 1]} : vector<2x128xf32> to vector<2x32xf32>
      %cst_86 = arith.constant 5.000000e-01 : f32
      %192 = vector.broadcast %cst_86 : f32 to vector<2x32xf32>
      %193 = arith.mulf %192, %191 : vector<2x32xf32>
      %194 = math.tanh %193 : vector<2x32xf32>
      %cst_87 = arith.constant 5.000000e-01 : f32
      %195 = vector.broadcast %cst_87 : f32 to vector<2x32xf32>
      %196 = arith.mulf %195, %194 : vector<2x32xf32>
      %cst_88 = arith.constant 5.000000e-01 : f32
      %197 = vector.broadcast %cst_88 : f32 to vector<2x32xf32>
      %198 = arith.addf %196, %197 : vector<2x32xf32>
      %199 = arith.mulf %188, %165 : vector<2x32xf32>
      %200 = arith.mulf %180, %190 : vector<2x32xf32>
      %201 = arith.addf %199, %200 : vector<2x32xf32>
      %202 = math.tanh %201 : vector<2x32xf32>
      %203 = arith.mulf %198, %202 : vector<2x32xf32>
      %204 = vector.broadcast %169 : vector<2x1xf32> to vector<2x32xf32>
      %205 = arith.mulf %203, %204 : vector<2x32xf32>
      %c0_89 = arith.constant 0 : index
      %c0_90 = arith.constant 0 : index
      %c0_91 = arith.constant 0 : index
      %c0_92 = arith.constant 0 : index
      %206 = vector.load %arg5[%c0_89, %c0_90, %c0_91, %c0_92] : memref<1x4x2x32xf32, #tpu.memory_space<vmem>>, vector<1x1x2x32xf32>
      %207 = vector.shape_cast %206 : vector<1x1x2x32xf32> to vector<2x32xf32>
      %208 = vector.shape_cast %205 : vector<2x32xf32> to vector<1x1x2x32xf32>
      tpu.vector_store %arg5[%c0_89, %c0_90, %c0_91, %c0_92], %208 {strides = array<i32>} : memref<1x4x2x32xf32, #tpu.memory_space<vmem>>, vector<1x1x2x32xf32>,
      %cst_93 = arith.constant 0.000000e+00 : f32
      %209 = vector.broadcast %cst_93 : f32 to vector<2x1xf32>
      %210 = arith.cmpf ogt, %169, %209 : vector<2x1xf32>
      %211 = vector.shape_cast %210 : vector<2x1xi1> to vector<2x1xi1>
      %212 = vector.broadcast %211 : vector<2x1xi1> to vector<2x32xi1>
      %213 = arith.select %212, %203, %162 : vector<2x32xi1>, vector<2x32xf32>
      %214 = vector.shape_cast %210 : vector<2x1xi1> to vector<2x1xi1>
      %215 = vector.broadcast %214 : vector<2x1xi1> to vector<2x32xi1>
      %216 = arith.select %215, %201, %165 : vector<2x32xi1>, vector<2x32xf32>
      %c0_94 = arith.constant 0 : index
      %c0_95 = arith.constant 0 : index
      %217 = vector.load %arg6[%c0_94, %c0_95] : memref<2x32xf32, #tpu.memory_space<vmem>>, vector<2x32xf32>
      tpu.vector_store %arg6[%c0_94, %c0_95], %213 {strides = array<i32>} : memref<2x32xf32, #tpu.memory_space<vmem>>, vector<2x32xf32>,
      %c0_96 = arith.constant 0 : index
      %c0_97 = arith.constant 0 : index
      %218 = vector.load %arg7[%c0_96, %c0_97] : memref<2x32xf32, #tpu.memory_space<vmem>>, vector<2x32xf32>
      tpu.vector_store %arg7[%c0_96, %c0_97], %216 {strides = array<i32>} : memref<2x32xf32, #tpu.memory_space<vmem>>, vector<2x32xf32>,
    } else {
    }
    return
  }
  func.func @transform_0(%arg0: i32, %arg1: i32) -> (i32, i32, i32, i32) {
    %c1_i32 = arith.constant 1 : i32
    %0 = arith.subi %c1_i32, %arg0 : i32
    %1 = arith.muli %0, %arg1 : i32
    %c1_i32_0 = arith.constant 1 : i32
    %2 = arith.subi %c1_i32_0, %arg1 : i32
    %3 = arith.muli %arg0, %2 : i32
    %4 = arith.addi %1, %3 : i32
    %c0_i32 = arith.constant 0 : i32
    %c0_i32_1 = arith.constant 0 : i32
    %c0_i32_2 = arith.constant 0 : i32
    return %arg0, %4, %c0_i32, %c0_i32_1 : i32, i32, i32, i32
  }
  func.func @transform_1(%arg0: i32, %arg1: i32) -> (i32, i32, i32) {
    %c1_i32 = arith.constant 1 : i32
    %0 = arith.subi %c1_i32, %arg0 : i32
    %1 = arith.muli %0, %arg1 : i32
    %c1_i32_0 = arith.constant 1 : i32
    %2 = arith.subi %c1_i32_0, %arg1 : i32
    %3 = arith.muli %arg0, %2 : i32
    %4 = arith.addi %1, %3 : i32
    %c0_i32 = arith.constant 0 : i32
    %c0_i32_1 = arith.constant 0 : i32
    %c0_i32_2 = arith.constant 0 : i32
    return %4, %c0_i32, %c0_i32_1 : i32, i32, i32
  }
  func.func @transform_2(%arg0: i32, %arg1: i32) -> (i32, i32, i32) {
    %c0_i32 = arith.constant 0 : i32
    %c0_i32_0 = arith.constant 0 : i32
    %c0_i32_1 = arith.constant 0 : i32
    return %arg0, %c0_i32, %c0_i32_0 : i32, i32, i32
  }
  func.func @transform_3(%arg0: i32, %arg1: i32) -> (i32, i32, i32, i32) {
    %c1_i32 = arith.constant 1 : i32
    %0 = arith.subi %c1_i32, %arg0 : i32
    %1 = arith.muli %0, %arg1 : i32
    %c1_i32_0 = arith.constant 1 : i32
    %2 = arith.subi %c1_i32_0, %arg1 : i32
    %3 = arith.muli %arg0, %2 : i32
    %4 = arith.addi %1, %3 : i32
    %c0_i32 = arith.constant 0 : i32
    %c0_i32_1 = arith.constant 0 : i32
    %c0_i32_2 = arith.constant 0 : i32
    return %arg0, %4, %c0_i32, %c0_i32_1 : i32, i32, i32, i32
  }
}

</mosaic_0001>

<llo_original>
// kernel: stacked_brnn_forward.2
$region0: #{stacked_brnn_forward.2}
  #allocation0 [shape = 'u32[]', space=smem, size = 0x4, offset = 0x4, fixed_abs, tag = 'smem constant byte address 0x4 - core index']
  #allocation1 [shape = 'u32[144,128]{1,0:T(1,128)}', space=vmem, size = 0x12000, scoped, tag = 'internal scratch']
  #allocation2 [shape = 'f32[2,32]{1,0:T(2,128)}', space=vmem, size = 0x400, scoped, tag = 'scratch operand']
  #allocation3 [shape = 'f32[2,32]{1,0:T(2,128)}', space=vmem, size = 0x400, scoped, tag = 'scratch operand']
  %s0 = inlined_call_operand.vmem [shape: f32[2,8,2,128], index: 0, kind: input, shape index: {}]
  %s1 = inlined_call_operand.vmem [shape: f32[8,2,1], index: 1, kind: input, shape index: {}]
  %s2 = inlined_call_operand.vmem [shape: bf16[2,32,128], index: 2, kind: input, shape index: {}]
  %s3 = inlined_call_operand.vmem [shape: f32[2,8,2,32], index: 3, kind: output, shape index: {}]
  %s4 = sld [smem:[#allocation0]]
  $region57: #{stacked_brnn_forward.2} parent=0
    _
  %s6 = ssub.s32 1, %s4
  %s7 = scalar_select 0, %s6, %s4
  loop: start=0, step=1, limit=6
  $region2: #{stacked_brnn_forward.2} parent=0 // loop_pre_header
    _
  $region3: #{stacked_brnn_forward.2} parent=0 // loop_header
    %s9 = sphi 0, %s13
    %p10 = scmp.ge.s32.totalorder %s9, 6
    %s16 = sphi 0, %s28
    %s17 = sphi 0, %s24
    %s18 = sphi 0, %s16
    %s19 = sphi 0, %s17
    %s20 = sphi 0, %s18
    %s21 = sphi 0, %s19
    %s43 = sphi 0, %s45
    %s46 = sphi 0, %s43
    %s47 = sphi 0, %s46
    %s63 = sphi 0, %s47
    %s79 = sphi 0, %s81
    %s82 = sphi 0, %s79
    %s83 = sphi 0, %s82
    %s99 = sphi 0, %s83
    %s105 = sphi 0, %s107
    %s108 = sphi 0, %s105
    %s109 = sphi 0, %s108
    %s125 = sphi 0, %s109
    %s143 = sphi 0, %s145
    %s146 = sphi 0, %s143
    %s147 = sphi 0, %s146
    %s163 = sphi 0, %s147
  $region4: #{stacked_brnn_forward.2} parent=0 // loop_header_branch
    %12 = sbr.rel (%p10) target = $region8
  $region5: #{stacked_brnn_forward.2} parent=0 // loop_body
    %s14 = ssub.s32 %s9, 1
    %s15 = ssub.s32 %s9, 2
    %s22 = sadd.s32 1, %s17
    %p23 = scmp.ge.s32.totalorder %s22, 2
    %s24 = scalar_select %p23, 0, %s22
    %s25 = sadd.s32 1, %s16
    %s26 = scalar_select %p23, %s25, %s16
    %p27 = scmp.ge.s32.totalorder %s26, 2
    %s28 = scalar_select %p27, 0, %s26
    %s29 = ssub.s32 1, %s16
    %s30 = smul.u32 %s29, %s17
    %s31 = ssub.s32 1, %s17
    %s32 = smul.u32 %s16, %s31
    %s33 = sadd.s32 %s30, %s32
    %s34 = ssub.s32 1, %s28
    %s35 = smul.u32 %s34, %s24
    %s36 = ssub.s32 1, %s24
    %s37 = smul.u32 %s28, %s36
    %s38 = sadd.s32 %s35, %s37
    %s39 = ssub.s32 %s16, %s28
    %s40 = ssub.s32 %s33, %s38
    %s41 = sor.u32 %s39, %s40
    %p42 = scmp.eq.s32.totalorder %s41, 0
    %s44 = sadd.s32 %s43, 1
    %s45 = scalar_select %p42, %s43, %s44
    %p48 = pneg %p42
    %p49 = scmp.eq.s32.totalorder %s9, 3
    %p50 = por %p48, %p49
    %p51 = scmp.ne.s32.totalorder %s43, %s46
    %p52 = scmp.eq.s32.totalorder %s9, 0
    %p53 = por %p51, %p52
    %p54 = scmp.ne.s32.totalorder %s43, %s46
    %p55 = scmp.eq.s32.totalorder %s14, 3
    %p56 = por %p54, %p55
    %p57 = scmp.ne.s32.totalorder %s46, %s47
    %p58 = scmp.eq.s32.totalorder %s14, 0
    %p59 = por %p57, %p58
    %p60 = scmp.ne.s32.totalorder %s46, %s47
    %p61 = scmp.eq.s32.totalorder %s15, 3
    %p62 = por %p60, %p61
    %p64 = scmp.ne.s32.totalorder %s47, %s63
    %p65 = scmp.eq.s32.totalorder %s15, 0
    %p66 = por %p64, %p65
    %s67 = ssub.s32 1, %s16
    %s68 = smul.u32 %s67, %s17
    %s69 = ssub.s32 1, %s17
    %s70 = smul.u32 %s16, %s69
    %s71 = sadd.s32 %s68, %s70
    %s72 = ssub.s32 1, %s28
    %s73 = smul.u32 %s72, %s24
    %s74 = ssub.s32 1, %s24
    %s75 = smul.u32 %s28, %s74
    %s76 = sadd.s32 %s73, %s75
    %s77 = ssub.s32 %s71, %s76
    %p78 = scmp.eq.s32.totalorder %s77, 0
    %s80 = sadd.s32 %s79, 1
    %s81 = scalar_select %p78, %s79, %s80
    %p84 = pneg %p78
    %p85 = scmp.eq.s32.totalorder %s9, 3
    %p86 = por %p84, %p85
    %p87 = scmp.ne.s32.totalorder %s79, %s82
    %p88 = scmp.eq.s32.totalorder %s9, 0
    %p89 = por %p87, %p88
    %p90 = scmp.ne.s32.totalorder %s79, %s82
    %p91 = scmp.eq.s32.totalorder %s14, 3
    %p92 = por %p90, %p91
    %p93 = scmp.ne.s32.totalorder %s82, %s83
    %p94 = scmp.eq.s32.totalorder %s14, 0
    %p95 = por %p93, %p94
    %p96 = scmp.ne.s32.totalorder %s82, %s83
    %p97 = scmp.eq.s32.totalorder %s15, 3
    %p98 = por %p96, %p97
    %p100 = scmp.ne.s32.totalorder %s83, %s99
    %p101 = scmp.eq.s32.totalorder %s15, 0
    %p102 = por %p100, %p101
    %s103 = ssub.s32 %s16, %s28
    %p104 = scmp.eq.s32.totalorder %s103, 0
    %s106 = sadd.s32 %s105, 1
    %s107 = scalar_select %p104, %s105, %s106
    %p110 = pneg %p104
    %p111 = scmp.eq.s32.totalorder %s9, 3
    %p112 = por %p110, %p111
    %p113 = scmp.ne.s32.totalorder %s105, %s108
    %p114 = scmp.eq.s32.totalorder %s9, 0
    %p115 = por %p113, %p114
    %p116 = scmp.ne.s32.totalorder %s105, %s108
    %p117 = scmp.eq.s32.totalorder %s14, 3
    %p118 = por %p116, %p117
    %p119 = scmp.ne.s32.totalorder %s108, %s109
    %p120 = scmp.eq.s32.totalorder %s14, 0
    %p121 = por %p119, %p120
    %p122 = scmp.ne.s32.totalorder %s108, %s109
    %p123 = scmp.eq.s32.totalorder %s15, 3
    %p124 = por %p122, %p123
    %p126 = scmp.ne.s32.totalorder %s109, %s125
    %p127 = scmp.eq.s32.totalorder %s15, 0
    %p128 = por %p126, %p127
    %s129 = ssub.s32 1, %s16
    %s130 = smul.u32 %s129, %s17
    %s131 = ssub.s32 1, %s17
    %s132 = smul.u32 %s16, %s131
    %s133 = sadd.s32 %s130, %s132
    %s134 = ssub.s32 1, %s28
    %s135 = smul.u32 %s134, %s24
    %s136 = ssub.s32 1, %s24
    %s137 = smul.u32 %s28, %s136
    %s138 = sadd.s32 %s135, %s137
    %s139 = ssub.s32 %s16, %s28
    %s140 = ssub.s32 %s133, %s138
    %s141 = sor.u32 %s139, %s140
    %p142 = scmp.eq.s32.totalorder %s141, 0
    %s144 = sadd.s32 %s143, 1
    %s145 = scalar_select %p142, %s143, %s144
    %p148 = pneg %p142
    %p149 = scmp.eq.s32.totalorder %s9, 3
    %p150 = por %p148, %p149
    %p151 = scmp.ne.s32.totalorder %s143, %s146
    %p152 = scmp.eq.s32.totalorder %s9, 0
    %p153 = por %p151, %p152
    %p154 = scmp.ne.s32.totalorder %s143, %s146
    %p155 = scmp.eq.s32.totalorder %s14, 3
    %p156 = por %p154, %p155
    %p157 = scmp.ne.s32.totalorder %s146, %s147
    %p158 = scmp.eq.s32.totalorder %s14, 0
    %p159 = por %p157, %p158
    %p160 = scmp.ne.s32.totalorder %s146, %s147
    %p161 = scmp.eq.s32.totalorder %s15, 3
    %p162 = por %p160, %p161
    %p164 = scmp.ne.s32.totalorder %s147, %s163
    %p165 = scmp.eq.s32.totalorder %s15, 0
    %p166 = por %p164, %p165
    %p167 = scmp.le.s32.totalorder 1, %s9
    %p168 = scmp.lt.s32.totalorder %s9, 5
    %p169 = pnand %p167, %p168
    %p170 = pneg %p169
    // Predicated region
    $region9: #{stacked_brnn_forward.2} parent=5 // pred_check
      _
    $region10: #{stacked_brnn_forward.2} parent=5 // pred_check_branch
      %172 = sbr.rel (%p169) target = $region12
    $region11: #{stacked_brnn_forward.2} parent=5 // pred_region
      %s173 = ssub.s32 %s9, 1
    $region12: #{stacked_brnn_forward.2} parent=5 // pred_fallthru
      _
    %p174 = scmp.lt.s32.totalorder %s9, 4
    // Predicated region
    $region13: #{stacked_brnn_forward.2} parent=5 // pred_check
      %p175 = pneg %p174
    $region14: #{stacked_brnn_forward.2} parent=5 // pred_check_branch
      %177 = sbr.rel (%p175) target = $region16
    $region15: #{stacked_brnn_forward.2} parent=5 // pred_region
      // Predicated region
      $region17: #{stacked_brnn_forward.2} parent=15 // pred_check
        %p178 = pneg %p53
      $region18: #{stacked_brnn_forward.2} parent=15 // pred_check_branch
        %180 = sbr.rel (%p178) target = $region20
      $region19: #{stacked_brnn_forward.2} parent=15 // pred_region
        %s181 = ssub.s32 1, %s16
        %s182 = smul.u32 %s181, %s17
        %s183 = ssub.s32 1, %s17
        %s184 = smul.u32 %s16, %s183
        %s185 = sadd.s32 %s182, %s184
        %s186 = smul.u32 4, %s185
        %p187 = scmp.lt.s32.totalorder %s16, 1
        %s188 = scalar_select %p187, %s16, 1
        %p189 = scmp.lt.s32.totalorder %s186, 7
        %s190 = scalar_select %p189, %s186, 7
        %s191 = smul.addr %s188, 8
        %s192 = sadd.s32 %s190, %s191
        %s193 = smul.addr %s192, 2
        %s194 = scalar_lea.vmem %s0, %s193
        %s195 = ssub.s32 1, %s16
        %s196 = smul.u32 %s195, %s17
        %s197 = ssub.s32 1, %s17
        %s198 = smul.u32 %s16, %s197
        %s199 = sadd.s32 %s196, %s198
        %s200 = smul.u32 4, %s199
      $region20: #{stacked_brnn_forward.2} parent=15 // pred_fallthru
        _
      // Predicated region
      $region21: #{stacked_brnn_forward.2} parent=15 // pred_check
        %p201 = pneg %p89
      $region22: #{stacked_brnn_forward.2} parent=15 // pred_check_branch
        %203 = sbr.rel (%p201) target = $region24
      $region23: #{stacked_brnn_forward.2} parent=15 // pred_region
        %s204 = ssub.s32 1, %s16
        %s205 = smul.u32 %s204, %s17
        %s206 = ssub.s32 1, %s17
        %s207 = smul.u32 %s16, %s206
        %s208 = sadd.s32 %s205, %s207
        %s209 = smul.u32 4, %s208
        %p210 = scmp.lt.s32.totalorder %s209, 7
        %s211 = scalar_select %p210, %s209, 7
        %s212 = smul.addr %s211, 2
        %s213 = scalar_lea.vmem %s1, %s212
        %s214 = ssub.s32 1, %s16
        %s215 = smul.u32 %s214, %s17
        %s216 = ssub.s32 1, %s17
        %s217 = smul.u32 %s16, %s216
        %s218 = sadd.s32 %s215, %s217
        %s219 = smul.u32 4, %s218
      $region24: #{stacked_brnn_forward.2} parent=15 // pred_fallthru
        _
      // Predicated region
      $region25: #{stacked_brnn_forward.2} parent=15 // pred_check
        %p220 = pneg %p115
      $region26: #{stacked_brnn_forward.2} parent=15 // pred_check_branch
        %222 = sbr.rel (%p220) target = $region28
      $region27: #{stacked_brnn_forward.2} parent=15 // pred_region
        %p223 = scmp.lt.s32.totalorder %s16, 1
        %s224 = scalar_select %p223, %s16, 1
        %s225 = smul.addr %s224, 4
        %s226 = smul.addr %s225, 4
        %s227 = scalar_lea.vmem %s2, %s226
      $region28: #{stacked_brnn_forward.2} parent=15 // pred_fallthru
        _
    $region16: #{stacked_brnn_forward.2} parent=5 // pred_fallthru
      _
    %p228 = scmp.le.s32.totalorder 1, %s9
    %p229 = scmp.lt.s32.totalorder %s9, 5
    %p230 = pnand %p228, %p229
    %p231 = pneg %p230
    // Predicated region
    $region29: #{stacked_brnn_forward.2} parent=5 // pred_check
      _
    $region30: #{stacked_brnn_forward.2} parent=5 // pred_check_branch
      %233 = sbr.rel (%p230) target = $region32
    $region31: #{stacked_brnn_forward.2} parent=5 // pred_region
      %s234 = ssub.s32 %s9, 1
      %s235 = ssub.s32 1, %s18
      %s236 = smul.u32 %s235, %s19
      %s237 = ssub.s32 1, %s19
      %s238 = smul.u32 %s18, %s237
      %s239 = sadd.s32 %s236, %s238
      %s240 = smul.u32 4, %s239
      %p241 = scmp.lt.s32.totalorder %s18, 1
      %s242 = scalar_select %p241, %s18, 1
      %p243 = scmp.lt.s32.totalorder %s240, 7
      %s244 = scalar_select %p243, %s240, 7
      %s245 = smul.addr %s242, 8
      %s246 = sadd.s32 %s244, %s245
      %s247 = smul.addr %s246, 2
      %s248 = scalar_lea.vmem %s0, %s247
      %p249 = pneg %p59
      %p250 = pneg %p56
      %s251 = ssub.s32 1, %s18
      %s252 = smul.u32 %s251, %s19
      %s253 = ssub.s32 1, %s19
      %s254 = smul.u32 %s18, %s253
      %s255 = sadd.s32 %s252, %s254
      %s256 = smul.u32 4, %s255
      %p257 = scmp.lt.s32.totalorder %s256, 7
      %s258 = scalar_select %p257, %s256, 7
      %s259 = smul.addr %s258, 2
      %s260 = scalar_lea.vmem %s1, %s259
      %p261 = pneg %p95
      %p262 = pneg %p92
      %p263 = scmp.lt.s32.totalorder %s18, 1
      %s264 = scalar_select %p263, %s18, 1
      %s265 = smul.addr %s264, 4
      %s266 = smul.addr %s265, 4
      %s267 = scalar_lea.vmem %s2, %s266
      %p268 = pneg %p121
      %p269 = pneg %p118
      %p270 = pneg %p159
      %p271 = pneg %p156
      %s272 = ssub.s32 1, %s18
      %s273 = smul.u32 %s272, %s19
      %s274 = ssub.s32 1, %s19
      %s275 = smul.u32 %s18, %s274
      %s276 = sadd.s32 %s273, %s275
      %s277 = smul.u32 4, %s276
      %p278 = scmp.lt.s32.totalorder %s18, 1
      %s279 = scalar_select %p278, %s18, 1
      %p280 = scmp.lt.s32.totalorder %s277, 7
      %s281 = scalar_select %p280, %s277, 7
      %s282 = smul.addr %s279, 8
      %s283 = sadd.s32 %s281, %s282
      %s284 = smul.addr %s283, 2
      %s285 = scalar_lea.vmem %s3, %s284
      %s286 = ssub.s32 1, %s18
      %s287 = smul.u32 %s286, %s19
      %s288 = ssub.s32 1, %s19
      %s289 = smul.u32 %s18, %s288
      %s290 = sadd.s32 %s287, %s289
      %s291 = smul.u32 4, %s290
      %p292 = scmp.lt.s32.totalorder %s18, 1
      %s293 = scalar_select %p292, %s18, 1
      %p294 = scmp.lt.s32.totalorder %s291, 7
      %s295 = scalar_select %p294, %s291, 7
      %s296 = smul.addr %s293, 8
      %s297 = sadd.s32 %s295, %s296
      %s298 = smul.addr %s297, 2
      %s299 = scalar_lea.vmem %s0, %s298
      %s300 = ssub.s32 1, %s18
      %s301 = smul.u32 %s300, %s19
      %s302 = ssub.s32 1, %s19
      %s303 = smul.u32 %s18, %s302
      %s304 = sadd.s32 %s301, %s303
      %s305 = smul.u32 4, %s304
      %s306 = ssub.s32 1, %s18
      %s307 = smul.u32 %s306, %s19
      %s308 = ssub.s32 1, %s19
      %s309 = smul.u32 %s18, %s308
      %s310 = sadd.s32 %s307, %s309
      %s311 = smul.u32 4, %s310
      %p312 = scmp.lt.s32.totalorder %s311, 7
      %s313 = scalar_select %p312, %s311, 7
      %s314 = smul.addr %s313, 2
      %s315 = scalar_lea.vmem %s1, %s314
      %s316 = ssub.s32 1, %s18
      %s317 = smul.u32 %s316, %s19
      %s318 = ssub.s32 1, %s19
      %s319 = smul.u32 %s18, %s318
      %s320 = sadd.s32 %s317, %s319
      %s321 = smul.u32 4, %s320
      %p322 = scmp.lt.s32.totalorder %s18, 1
      %s323 = scalar_select %p322, %s18, 1
      %s324 = smul.addr %s323, 4
      %s325 = smul.addr %s324, 4
      %s326 = scalar_lea.vmem %s2, %s325
      %s327 = ssub.s32 1, %s18
      %s328 = smul.u32 %s327, %s19
      %s329 = ssub.s32 1, %s19
      %s330 = smul.u32 %s18, %s329
      %s331 = sadd.s32 %s328, %s330
      %s332 = smul.u32 4, %s331
      %p333 = scmp.lt.s32.totalorder %s18, 1
      %s334 = scalar_select %p333, %s18, 1
      %p335 = scmp.lt.s32.totalorder %s332, 7
      %s336 = scalar_select %p335, %s332, 7
      %s337 = smul.addr %s334, 8
      %s338 = sadd.s32 %s336, %s337
      %s339 = smul.addr %s338, 2
      %s340 = scalar_lea.vmem %s3, %s339
      %s341 = ssub.s32 1, %s18
      %s342 = smul.u32 %s341, %s19
      %s343 = ssub.s32 1, %s19
      %s344 = smul.u32 %s18, %s343
      %s345 = sadd.s32 %s342, %s344
      %s346 = smul.u32 4, %s345
      %p348 = scmp.eq.s32.totalorder %s19, 0
      // Predicated region
      $region33: #{stacked_brnn_forward.2} parent=31 // pred_check
        %p349 = pneg %p348
      $region34: #{stacked_brnn_forward.2} parent=31 // pred_check_branch
        %351 = sbr.rel (%p349) target = $region36
      $region35: #{stacked_brnn_forward.2} parent=31 // pred_region
        %vm352 = vcmask 254976
        %353 = vst.msk [vmem:[#allocation2] sm:$0x3] %vm352, 0.0
        %354 = vst.msk [vmem:[#allocation3] sm:$0x3] %vm352, 0.0
      $region36: #{stacked_brnn_forward.2} parent=31 // pred_fallthru
        _
      %v355 = vld [vmem:[%s326] sm:$0xf]
      %v356 = vld [vmem:[%s326 + $0x4] sm:$0xf]
      %v357 = vld [vmem:[%s326 + $0x8] sm:$0xf]
      %v358 = vld [vmem:[%s326 + $0xc] sm:$0xf]
      %p359 = scmp.eq.s32.totalorder %s18, 0
      // Predicated region
      $region37: #{stacked_brnn_forward.2} parent=31 // pred_check
        %p360 = pneg %p359
      $region38: #{stacked_brnn_forward.2} parent=31 // pred_check_branch
        %362 = sbr.rel (%p360) target = $region40
      $region39: #{stacked_brnn_forward.2} parent=31 // pred_region
        %v363 = vld [vmem:[#allocation2] sm:$0x3]
        %v364 = vld [vmem:[#allocation3] sm:$0x3]
        %v365 = vld [vmem:[%s299] sm:$0x3]
        %v366 = vld [vmem:[%s315] sm:$0x3]
        %v367 = vpack.c.bf16 %v363, %v363
        %v372 = vunpack.c.l.b16 %v355
        %v373 = vunpack.c.l.b16 %v356
        %v374 = vunpack.c.l.b16 %v357
        %v375 = vunpack.c.l.b16 %v358
        %v376 = vpack.c.b16 %v373, %v372
        %v377 = vpack.c.b16 %v375, %v374
        %vm380 = vcmask 261120
        %v382 = vsel %vm380, %v367, 0
        %384 = vmatprep.subr.bf16.mxu0 0
        %385 = vmatpush1.bf16.msra.mxu0 %v376
        %386 = vmatprep.subr.bf16.mxu0 0
        %387 = vmatpush1.bf16.msra.mxu0 %v377
        %388 = vmatprep.subr.bf16.mxu0 0
        %389 = vmatpush1.bf16.msra.mxu0 0
        %390 = vmatprep.subr.bf16.mxu0 0
        %391 = vmatpush1.bf16.msra.mxu0 0
        %392 = vmatprep.subr.bf16.mxu0 0
        %393 = vmatpush1.bf16.msra.mxu0 0
        %394 = vmatprep.subr.bf16.mxu0 0
        %395 = vmatpush1.bf16.msra.mxu0 0
        %396 = vmatprep.subr.bf16.mxu0 0
        %397 = vmatpush1.bf16.msra.mxu0 0
        %398 = vmatprep.subr.bf16.mxu0 0
        %399 = vmatpush1.bf16.msra.mxu0 0
        %400 = vmatprep.subr.bf16.mxu0 0
        %401 = vmatpush1.bf16.msra.mxu0 0
        %402 = vmatprep.subr.bf16.mxu0 0
        %403 = vmatpush1.bf16.msra.mxu0 0
        %404 = vmatprep.subr.bf16.mxu0 0
        %405 = vmatpush1.bf16.msra.mxu0 0
        %406 = vmatprep.subr.bf16.mxu0 0
        %407 = vmatpush1.bf16.msra.mxu0 0
        %408 = vmatprep.subr.bf16.mxu0 0
        %409 = vmatpush1.bf16.msra.mxu0 0
        %410 = vmatprep.subr.bf16.mxu0 0
        %411 = vmatpush1.bf16.msra.mxu0 0
        %412 = vmatprep.subr.bf16.mxu0 0
        %413 = vmatpush1.bf16.msra.mxu0 0
        %414 = vmatprep.subr.bf16.mxu0 0
        %415 = vmatpush1.bf16.msra.mxu0 0
        %416 = vmatprep.mubr.bf16.mxu0 0
        %417 = vmatmul.mubr.bf16.gmra.mrb[0].mxu0 %v382
        %v418 = vpop.f32.mrb[0].mxu0
        %v419 = vadd.f32 0.0, %v418
        %v420 = vpop.f32.mrb[0].mxu0
        %v421 = vpop.f32.mrb[0].mxu0
        %v422 = vpop.f32.mrb[0].mxu0
        %423 = vdwg.mxu0
        %v424 = vadd.f32 %v365, %v419
        %v425 = vmul.f32 %v424, 0.5
        %v426 = vtanh.pop %v425
        %v427 = vmul.f32 %v426, 0.5
        %v428 = vadd.f32 %v427, 0.5
        %v429 = vtanh.pop %v424
        %431 = vrot.lane.b32.xlu0 %v364, 32
        %v432 = vpop.permute.xlu0 %431
        %v434 = vmul.f32 %v428, %v432
        %436 = vrot.lane.b32.xlu0 %v429, 64
        %v437 = vpop.permute.xlu0 %436
        %v439 = vmul.f32 %v428, %v437
        %441 = vrot.lane.b32.xlu0 %v439, 32
        %v442 = vpop.permute.xlu0 %441
        %v444 = vadd.f32 %v434, %v442
        %v445 = vtanh.pop %v444
        %447 = vrot.lane.b32.xlu0 %v445, 64
        %v448 = vpop.permute.xlu0 %447
        %v450 = vmul.f32 %v428, %v448
        %452 = vset.pattern.permute.xlu0 0
        %453 = vperm.xlu0 %452, %v366
        %v454 = vpop.permute.xlu0 %453
        %v456 = vmul.f32 %v450, %v454
        %458 = vrot.lane.b32.xlu0 %v456, 32
        %v459 = vpop.permute.xlu0 %458
        %vm461 = vcmask 254976
        %462 = vst.msk [vmem:[%s340] sm:$0x3] %vm461, %v459
        %vm463 = vcmp.gt.f32.partialorder %v366, 0.0
        %v464 = vsel %vm463, 1, 0
        %465 = vset.pattern.permute.xlu0 0
        %466 = vperm.xlu0 %465, %v464
        %v467 = vpop.permute.xlu0 %466
        %vm468 = vcmp.eq.s32.totalorder %v467, 1
        %470 = vrot.lane.b32.xlu0 %v363, 96
        %v471 = vpop.permute.xlu0 %470
        %v473 = vsel %vm468, %v450, %v471
        %v474 = vsel %vm468, %v444, %v432
        %s475 = scalar_lea.vmem %s299, 2
        %v476 = vld [vmem:[%s475] sm:$0x3]
        %s477 = scalar_lea.vmem %s315, 2
        %v478 = vld [vmem:[%s477] sm:$0x3]
        %v479 = vpack.c.bf16 %v473, %v473
        %481 = vrot.lane.b32.xlu0 %v479, 32
        %v482 = vpop.permute.xlu0 %481
        %v484 = vsel %vm380, %v482, 0
        %486 = vmatprep.subr.bf16.mxu0 0
        %487 = vmatpush1.bf16.msra.mxu0 %v376
        %488 = vmatprep.subr.bf16.mxu0 0
        %489 = vmatpush1.bf16.msra.mxu0 %v377
        %490 = vmatprep.subr.bf16.mxu0 0
        %491 = vmatpush1.bf16.msra.mxu0 0
        %492 = vmatprep.subr.bf16.mxu0 0
        %493 = vmatpush1.bf16.msra.mxu0 0
        %494 = vmatprep.subr.bf16.mxu0 0
        %495 = vmatpush1.bf16.msra.mxu0 0
        %496 = vmatprep.subr.bf16.mxu0 0
        %497 = vmatpush1.bf16.msra.mxu0 0
        %498 = vmatprep.subr.bf16.mxu0 0
        %499 = vmatpush1.bf16.msra.mxu0 0
        %500 = vmatprep.subr.bf16.mxu0 0
        %501 = vmatpush1.bf16.msra.mxu0 0
        %502 = vmatprep.subr.bf16.mxu0 0
        %503 = vmatpush1.bf16.msra.mxu0 0
        %504 = vmatprep.subr.bf16.mxu0 0
        %505 = vmatpush1.bf16.msra.mxu0 0
        %506 = vmatprep.subr.bf16.mxu0 0
        %507 = vmatpush1.bf16.msra.mxu0 0
        %508 = vmatprep.subr.bf16.mxu0 0
        %509 = vmatpush1.bf16.msra.mxu0 0
        %510 = vmatprep.subr.bf16.mxu0 0
        %511 = vmatpush1.bf16.msra.mxu0 0
        %512 = vmatprep.subr.bf16.mxu0 0
        %513 = vmatpush1.bf16.msra.mxu0 0
        %514 = vmatprep.subr.bf16.mxu0 0
        %515 = vmatpush1.bf16.msra.mxu0 0
        %516 = vmatprep.subr.bf16.mxu0 0
        %517 = vmatpush1.bf16.msra.mxu0 0
        %518 = vmatprep.mubr.bf16.mxu0 0
        %519 = vmatmul.mubr.bf16.gmra.mrb[0].mxu0 %v484
        %v520 = vpop.f32.mrb[0].mxu0
        %v521 = vadd.f32 0.0, %v520
        %v522 = vpop.f32.mrb[0].mxu0
        %v523 = vpop.f32.mrb[0].mxu0
        %v524 = vpop.f32.mrb[0].mxu0
        %525 = vdwg.mxu0
        %v526 = vadd.f32 %v476, %v521
        %v527 = vmul.f32 %v526, 0.5
        %v528 = vtanh.pop %v527
        %v529 = vmul.f32 %v528, 0.5
        %v530 = vadd.f32 %v529, 0.5
        %v531 = vtanh.pop %v526
        %v532 = vmul.f32 %v530, %v474
        %534 = vrot.lane.b32.xlu0 %v531, 64
        %v535 = vpop.permute.xlu0 %534
        %v537 = vmul.f32 %v530, %v535
        %539 = vrot.lane.b32.xlu0 %v537, 32
        %v540 = vpop.permute.xlu0 %539
        %v542 = vadd.f32 %v532, %v540
        %v543 = vtanh.pop %v542
        %545 = vrot.lane.b32.xlu0 %v543, 64
        %v546 = vpop.permute.xlu0 %545
        %v548 = vmul.f32 %v530, %v546
        %550 = vset.pattern.permute.xlu0 0
        %551 = vperm.xlu0 %550, %v478
        %v552 = vpop.permute.xlu0 %551
        %v554 = vmul.f32 %v548, %v552
        %556 = vrot.lane.b32.xlu0 %v554, 32
        %v557 = vpop.permute.xlu0 %556
        %s559 = scalar_lea.vmem %s340, 2
        %560 = vst.msk [vmem:[%s559] sm:$0x3] %vm461, %v557
        %vm561 = vcmp.gt.f32.partialorder %v478, 0.0
        %v562 = vsel %vm561, 1, 0
        %563 = vset.pattern.permute.xlu0 0
        %564 = vperm.xlu0 %563, %v562
        %v565 = vpop.permute.xlu0 %564
        %vm566 = vcmp.eq.s32.totalorder %v565, 1
        %v567 = vsel %vm566, %v548, %v473
        %v568 = vsel %vm566, %v542, %v474
        %s569 = scalar_lea.vmem %s299, 4
        %v570 = vld [vmem:[%s569] sm:$0x3]
        %s571 = scalar_lea.vmem %s315, 4
        %v572 = vld [vmem:[%s571] sm:$0x3]
        %v573 = vpack.c.bf16 %v567, %v567
        %575 = vrot.lane.b32.xlu0 %v573, 32
        %v576 = vpop.permute.xlu0 %575
        %v578 = vsel %vm380, %v576, 0
        %580 = vmatprep.subr.bf16.mxu0 0
        %581 = vmatpush1.bf16.msra.mxu0 %v376
        %582 = vmatprep.subr.bf16.mxu0 0
        %583 = vmatpush1.bf16.msra.mxu0 %v377
        %584 = vmatprep.subr.bf16.mxu0 0
        %585 = vmatpush1.bf16.msra.mxu0 0
        %586 = vmatprep.subr.bf16.mxu0 0
        %587 = vmatpush1.bf16.msra.mxu0 0
        %588 = vmatprep.subr.bf16.mxu0 0
        %589 = vmatpush1.bf16.msra.mxu0 0
        %590 = vmatprep.subr.bf16.mxu0 0
        %591 = vmatpush1.bf16.msra.mxu0 0
        %592 = vmatprep.subr.bf16.mxu0 0
        %593 = vmatpush1.bf16.msra.mxu0 0
        %594 = vmatprep.subr.bf16.mxu0 0
        %595 = vmatpush1.bf16.msra.mxu0 0
        %596 = vmatprep.subr.bf16.mxu0 0
        %597 = vmatpush1.bf16.msra.mxu0 0
        %598 = vmatprep.subr.bf16.mxu0 0
        %599 = vmatpush1.bf16.msra.mxu0 0
        %600 = vmatprep.subr.bf16.mxu0 0
        %601 = vmatpush1.bf16.msra.mxu0 0
        %602 = vmatprep.subr.bf16.mxu0 0
        %603 = vmatpush1.bf16.msra.mxu0 0
        %604 = vmatprep.subr.bf16.mxu0 0
        %605 = vmatpush1.bf16.msra.mxu0 0
        %606 = vmatprep.subr.bf16.mxu0 0
        %607 = vmatpush1.bf16.msra.mxu0 0
        %608 = vmatprep.subr.bf16.mxu0 0
        %609 = vmatpush1.bf16.msra.mxu0 0
        %610 = vmatprep.subr.bf16.mxu0 0
        %611 = vmatpush1.bf16.msra.mxu0 0
        %612 = vmatprep.mubr.bf16.mxu0 0
        %613 = vmatmul.mubr.bf16.gmra.mrb[0].mxu0 %v578
        %v614 = vpop.f32.mrb[0].mxu0
        %v615 = vadd.f32 0.0, %v614
        %v616 = vpop.f32.mrb[0].mxu0
        %v617 = vpop.f32.mrb[0].mxu0
        %v618 = vpop.f32.mrb[0].mxu0
        %619 = vdwg.mxu0
        %v620 = vadd.f32 %v570, %v615
        %v621 = vmul.f32 %v620, 0.5
        %v622 = vtanh.pop %v621
        %v623 = vmul.f32 %v622, 0.5
        %v624 = vadd.f32 %v623, 0.5
        %v625 = vtanh.pop %v620
        %v626 = vmul.f32 %v624, %v568
        %628 = vrot.lane.b32.xlu0 %v625, 64
        %v629 = vpop.permute.xlu0 %628
        %v631 = vmul.f32 %v624, %v629
        %633 = vrot.lane.b32.xlu0 %v631, 32
        %v634 = vpop.permute.xlu0 %633
        %v636 = vadd.f32 %v626, %v634
        %v637 = vtanh.pop %v636
        %639 = vrot.lane.b32.xlu0 %v637, 64
        %v640 = vpop.permute.xlu0 %639
        %v642 = vmul.f32 %v624, %v640
        %644 = vset.pattern.permute.xlu0 0
        %645 = vperm.xlu0 %644, %v572
        %v646 = vpop.permute.xlu0 %645
        %v648 = vmul.f32 %v642, %v646
        %650 = vrot.lane.b32.xlu0 %v648, 32
        %v651 = vpop.permute.xlu0 %650
        %s653 = scalar_lea.vmem %s340, 4
        %654 = vst.msk [vmem:[%s653] sm:$0x3] %vm461, %v651
        %vm655 = vcmp.gt.f32.partialorder %v572, 0.0
        %v656 = vsel %vm655, 1, 0
        %657 = vset.pattern.permute.xlu0 0
        %658 = vperm.xlu0 %657, %v656
        %v659 = vpop.permute.xlu0 %658
        %vm660 = vcmp.eq.s32.totalorder %v659, 1
        %v661 = vsel %vm660, %v642, %v567
        %v662 = vsel %vm660, %v636, %v568
        %s663 = scalar_lea.vmem %s299, 6
        %v664 = vld [vmem:[%s663] sm:$0x3]
        %s665 = scalar_lea.vmem %s315, 6
        %v666 = vld [vmem:[%s665] sm:$0x3]
        %v667 = vpack.c.bf16 %v661, %v661
        %669 = vrot.lane.b32.xlu0 %v667, 32
        %v670 = vpop.permute.xlu0 %669
        %v672 = vsel %vm380, %v670, 0
        %674 = vmatprep.subr.bf16.mxu0 0
        %675 = vmatpush1.bf16.msra.mxu0 %v376
        %676 = vmatprep.subr.bf16.mxu0 0
        %677 = vmatpush1.bf16.msra.mxu0 %v377
        %678 = vmatprep.subr.bf16.mxu0 0
        %679 = vmatpush1.bf16.msra.mxu0 0
        %680 = vmatprep.subr.bf16.mxu0 0
        %681 = vmatpush1.bf16.msra.mxu0 0
        %682 = vmatprep.subr.bf16.mxu0 0
        %683 = vmatpush1.bf16.msra.mxu0 0
        %684 = vmatprep.subr.bf16.mxu0 0
        %685 = vmatpush1.bf16.msra.mxu0 0
        %686 = vmatprep.subr.bf16.mxu0 0
        %687 = vmatpush1.bf16.msra.mxu0 0
        %688 = vmatprep.subr.bf16.mxu0 0
        %689 = vmatpush1.bf16.msra.mxu0 0
        %690 = vmatprep.subr.bf16.mxu0 0
        %691 = vmatpush1.bf16.msra.mxu0 0
        %692 = vmatprep.subr.bf16.mxu0 0
        %693 = vmatpush1.bf16.msra.mxu0 0
        %694 = vmatprep.subr.bf16.mxu0 0
        %695 = vmatpush1.bf16.msra.mxu0 0
        %696 = vmatprep.subr.bf16.mxu0 0
        %697 = vmatpush1.bf16.msra.mxu0 0
        %698 = vmatprep.subr.bf16.mxu0 0
        %699 = vmatpush1.bf16.msra.mxu0 0
        %700 = vmatprep.subr.bf16.mxu0 0
        %701 = vmatpush1.bf16.msra.mxu0 0
        %702 = vmatprep.subr.bf16.mxu0 0
        %703 = vmatpush1.bf16.msra.mxu0 0
        %704 = vmatprep.subr.bf16.mxu0 0
        %705 = vmatpush1.bf16.msra.mxu0 0
        %706 = vmatprep.mubr.bf16.mxu0 0
        %707 = vmatmul.mubr.bf16.gmra.mrb[0].mxu0 %v672
        %v708 = vpop.f32.mrb[0].mxu0
        %v709 = vadd.f32 0.0, %v708
        %v710 = vpop.f32.mrb[0].mxu0
        %v711 = vpop.f32.mrb[0].mxu0
        %v712 = vpop.f32.mrb[0].mxu0
        %713 = vdwg.mxu0
        %v714 = vadd.f32 %v664, %v709
        %v715 = vmul.f32 %v714, 0.5
        %v716 = vtanh.pop %v715
        %v717 = vmul.f32 %v716, 0.5
        %v718 = vadd.f32 %v717, 0.5
        %v719 = vtanh.pop %v714
        %v720 = vmul.f32 %v718, %v662
        %722 = vrot.lane.b32.xlu0 %v719, 64
        %v723 = vpop.permute.xlu0 %722
        %v725 = vmul.f32 %v718, %v723
        %727 = vrot.lane.b32.xlu0 %v725, 32
        %v728 = vpop.permute.xlu0 %727
        %v730 = vadd.f32 %v720, %v728
        %v731 = vtanh.pop %v730
        %733 = vrot.lane.b32.xlu0 %v731, 64
        %v734 = vpop.permute.xlu0 %733
        %v736 = vmul.f32 %v718, %v734
        %738 = vset.pattern.permute.xlu0 0
        %739 = vperm.xlu0 %738, %v666
        %v740 = vpop.permute.xlu0 %739
        %v742 = vmul.f32 %v736, %v740
        %744 = vrot.lane.b32.xlu0 %v742, 32
        %v745 = vpop.permute.xlu0 %744
        %s747 = scalar_lea.vmem %s340, 6
        %748 = vst.msk [vmem:[%s747] sm:$0x3] %vm461, %v745
        %vm749 = vcmp.gt.f32.partialorder %v666, 0.0
        %v750 = vsel %vm749, 1, 0
        %751 = vset.pattern.permute.xlu0 0
        %752 = vperm.xlu0 %751, %v750
        %v753 = vpop.permute.xlu0 %752
        %vm754 = vcmp.eq.s32.totalorder %v753, 1
        %v755 = vsel %vm754, %v736, %v661
        %v756 = vsel %vm754, %v730, %v662
        %758 = vrot.lane.b32.xlu0 %v755, 32
        %v759 = vpop.permute.xlu0 %758
        %761 = vst.msk [vmem:[#allocation2] sm:$0x3] %vm461, %v759
        %763 = vrot.lane.b32.xlu0 %v756, 96
        %v764 = vpop.permute.xlu0 %763
        %766 = vst.msk [vmem:[#allocation3] sm:$0x3] %vm461, %v764
      $region40: #{stacked_brnn_forward.2} parent=31 // pred_fallthru
        _
      %p767 = scmp.eq.s32.totalorder %s18, 1
      // Predicated region
      $region41: #{stacked_brnn_forward.2} parent=31 // pred_check
        %p768 = pneg %p767
      $region42: #{stacked_brnn_forward.2} parent=31 // pred_check_branch
        %770 = sbr.rel (%p768) target = $region44
      $region43: #{stacked_brnn_forward.2} parent=31 // pred_region
        %v771 = vld [vmem:[#allocation2] sm:$0x3]
        %v772 = vld [vmem:[#allocation3] sm:$0x3]
        %s773 = scalar_lea.vmem %s299, 6
        %v774 = vld [vmem:[%s773] sm:$0x3]
        %s775 = scalar_lea.vmem %s315, 6
        %v776 = vld [vmem:[%s775] sm:$0x3]
        %v777 = vpack.c.bf16 %v771, %v771
        %v782 = vunpack.c.l.b16 %v355
        %v783 = vunpack.c.l.b16 %v356
        %v784 = vunpack.c.l.b16 %v357
        %v785 = vunpack.c.l.b16 %v358
        %v786 = vpack.c.b16 %v783, %v782
        %v787 = vpack.c.b16 %v785, %v784
        %vm790 = vcmask 261120
        %v792 = vsel %vm790, %v777, 0
        %794 = vmatprep.subr.bf16.mxu0 0
        %795 = vmatpush1.bf16.msra.mxu0 %v786
        %796 = vmatprep.subr.bf16.mxu0 0
        %797 = vmatpush1.bf16.msra.mxu0 %v787
        %798 = vmatprep.subr.bf16.mxu0 0
        %799 = vmatpush1.bf16.msra.mxu0 0
        %800 = vmatprep.subr.bf16.mxu0 0
        %801 = vmatpush1.bf16.msra.mxu0 0
        %802 = vmatprep.subr.bf16.mxu0 0
        %803 = vmatpush1.bf16.msra.mxu0 0
        %804 = vmatprep.subr.bf16.mxu0 0
        %805 = vmatpush1.bf16.msra.mxu0 0
        %806 = vmatprep.subr.bf16.mxu0 0
        %807 = vmatpush1.bf16.msra.mxu0 0
        %808 = vmatprep.subr.bf16.mxu0 0
        %809 = vmatpush1.bf16.msra.mxu0 0
        %810 = vmatprep.subr.bf16.mxu0 0
        %811 = vmatpush1.bf16.msra.mxu0 0
        %812 = vmatprep.subr.bf16.mxu0 0
        %813 = vmatpush1.bf16.msra.mxu0 0
        %814 = vmatprep.subr.bf16.mxu0 0
        %815 = vmatpush1.bf16.msra.mxu0 0
        %816 = vmatprep.subr.bf16.mxu0 0
        %817 = vmatpush1.bf16.msra.mxu0 0
        %818 = vmatprep.subr.bf16.mxu0 0
        %819 = vmatpush1.bf16.msra.mxu0 0
        %820 = vmatprep.subr.bf16.mxu0 0
        %821 = vmatpush1.bf16.msra.mxu0 0
        %822 = vmatprep.subr.bf16.mxu0 0
        %823 = vmatpush1.bf16.msra.mxu0 0
        %824 = vmatprep.subr.bf16.mxu0 0
        %825 = vmatpush1.bf16.msra.mxu0 0
        %826 = vmatprep.mubr.bf16.mxu0 0
        %827 = vmatmul.mubr.bf16.gmra.mrb[0].mxu0 %v792
        %v828 = vpop.f32.mrb[0].mxu0
        %v829 = vadd.f32 0.0, %v828
        %v830 = vpop.f32.mrb[0].mxu0
        %v831 = vpop.f32.mrb[0].mxu0
        %v832 = vpop.f32.mrb[0].mxu0
        %833 = vdwg.mxu0
        %v834 = vadd.f32 %v774, %v829
        %v835 = vmul.f32 %v834, 0.5
        %v836 = vtanh.pop %v835
        %v837 = vmul.f32 %v836, 0.5
        %v838 = vadd.f32 %v837, 0.5
        %v839 = vtanh.pop %v834
        %841 = vrot.lane.b32.xlu0 %v772, 32
        %v842 = vpop.permute.xlu0 %841
        %v844 = vmul.f32 %v838, %v842
        %846 = vrot.lane.b32.xlu0 %v839, 64
        %v847 = vpop.permute.xlu0 %846
        %v849 = vmul.f32 %v838, %v847
        %851 = vrot.lane.b32.xlu0 %v849, 32
        %v852 = vpop.permute.xlu0 %851
        %v854 = vadd.f32 %v844, %v852
        %v855 = vtanh.pop %v854
        %857 = vrot.lane.b32.xlu0 %v855, 64
        %v858 = vpop.permute.xlu0 %857
        %v860 = vmul.f32 %v838, %v858
        %862 = vset.pattern.permute.xlu0 0
        %863 = vperm.xlu0 %862, %v776
        %v864 = vpop.permute.xlu0 %863
        %v866 = vmul.f32 %v860, %v864
        %868 = vrot.lane.b32.xlu0 %v866, 32
        %v869 = vpop.permute.xlu0 %868
        %s871 = scalar_lea.vmem %s340, 6
        %vm872 = vcmask 254976
        %873 = vst.msk [vmem:[%s871] sm:$0x3] %vm872, %v869
        %vm874 = vcmp.gt.f32.partialorder %v776, 0.0
        %v875 = vsel %vm874, 1, 0
        %876 = vset.pattern.permute.xlu0 0
        %877 = vperm.xlu0 %876, %v875
        %v878 = vpop.permute.xlu0 %877
        %vm879 = vcmp.eq.s32.totalorder %v878, 1
        %881 = vrot.lane.b32.xlu0 %v771, 96
        %v882 = vpop.permute.xlu0 %881
        %v884 = vsel %vm879, %v860, %v882
        %v885 = vsel %vm879, %v854, %v842
        %s886 = scalar_lea.vmem %s299, 4
        %v887 = vld [vmem:[%s886] sm:$0x3]
        %s888 = scalar_lea.vmem %s315, 4
        %v889 = vld [vmem:[%s888] sm:$0x3]
        %v890 = vpack.c.bf16 %v884, %v884
        %892 = vrot.lane.b32.xlu0 %v890, 32
        %v893 = vpop.permute.xlu0 %892
        %v895 = vsel %vm790, %v893, 0
        %897 = vmatprep.subr.bf16.mxu0 0
        %898 = vmatpush1.bf16.msra.mxu0 %v786
        %899 = vmatprep.subr.bf16.mxu0 0
        %900 = vmatpush1.bf16.msra.mxu0 %v787
        %901 = vmatprep.subr.bf16.mxu0 0
        %902 = vmatpush1.bf16.msra.mxu0 0
        %903 = vmatprep.subr.bf16.mxu0 0
        %904 = vmatpush1.bf16.msra.mxu0 0
        %905 = vmatprep.subr.bf16.mxu0 0
        %906 = vmatpush1.bf16.msra.mxu0 0
        %907 = vmatprep.subr.bf16.mxu0 0
        %908 = vmatpush1.bf16.msra.mxu0 0
        %909 = vmatprep.subr.bf16.mxu0 0
        %910 = vmatpush1.bf16.msra.mxu0 0
        %911 = vmatprep.subr.bf16.mxu0 0
        %912 = vmatpush1.bf16.msra.mxu0 0
        %913 = vmatprep.subr.bf16.mxu0 0
        %914 = vmatpush1.bf16.msra.mxu0 0
        %915 = vmatprep.subr.bf16.mxu0 0
        %916 = vmatpush1.bf16.msra.mxu0 0
        %917 = vmatprep.subr.bf16.mxu0 0
        %918 = vmatpush1.bf16.msra.mxu0 0
        %919 = vmatprep.subr.bf16.mxu0 0
        %920 = vmatpush1.bf16.msra.mxu0 0
        %921 = vmatprep.subr.bf16.mxu0 0
        %922 = vmatpush1.bf16.msra.mxu0 0
        %923 = vmatprep.subr.bf16.mxu0 0
        %924 = vmatpush1.bf16.msra.mxu0 0
        %925 = vmatprep.subr.bf16.mxu0 0
        %926 = vmatpush1.bf16.msra.mxu0 0
        %927 = vmatprep.subr.bf16.mxu0 0
        %928 = vmatpush1.bf16.msra.mxu0 0
        %929 = vmatprep.mubr.bf16.mxu0 0
        %930 = vmatmul.mubr.bf16.gmra.mrb[0].mxu0 %v895
        %v931 = vpop.f32.mrb[0].mxu0
        %v932 = vadd.f32 0.0, %v931
        %v933 = vpop.f32.mrb[0].mxu0
        %v934 = vpop.f32.mrb[0].mxu0
        %v935 = vpop.f32.mrb[0].mxu0
        %936 = vdwg.mxu0
        %v937 = vadd.f32 %v887, %v932
        %v938 = vmul.f32 %v937, 0.5
        %v939 = vtanh.pop %v938
        %v940 = vmul.f32 %v939, 0.5
        %v941 = vadd.f32 %v940, 0.5
        %v942 = vtanh.pop %v937
        %v943 = vmul.f32 %v941, %v885
        %945 = vrot.lane.b32.xlu0 %v942, 64
        %v946 = vpop.permute.xlu0 %945
        %v948 = vmul.f32 %v941, %v946
        %950 = vrot.lane.b32.xlu0 %v948, 32
        %v951 = vpop.permute.xlu0 %950
        %v953 = vadd.f32 %v943, %v951
        %v954 = vtanh.pop %v953
        %956 = vrot.lane.b32.xlu0 %v954, 64
        %v957 = vpop.permute.xlu0 %956
        %v959 = vmul.f32 %v941, %v957
        %961 = vset.pattern.permute.xlu0 0
        %962 = vperm.xlu0 %961, %v889
        %v963 = vpop.permute.xlu0 %962
        %v965 = vmul.f32 %v959, %v963
        %967 = vrot.lane.b32.xlu0 %v965, 32
        %v968 = vpop.permute.xlu0 %967
        %s970 = scalar_lea.vmem %s340, 4
        %971 = vst.msk [vmem:[%s970] sm:$0x3] %vm872, %v968
        %vm972 = vcmp.gt.f32.partialorder %v889, 0.0
        %v973 = vsel %vm972, 1, 0
        %974 = vset.pattern.permute.xlu0 0
        %975 = vperm.xlu0 %974, %v973
        %v976 = vpop.permute.xlu0 %975
        %vm977 = vcmp.eq.s32.totalorder %v976, 1
        %v978 = vsel %vm977, %v959, %v884
        %v979 = vsel %vm977, %v953, %v885
        %s980 = scalar_lea.vmem %s299, 2
        %v981 = vld [vmem:[%s980] sm:$0x3]
        %s982 = scalar_lea.vmem %s315, 2
        %v983 = vld [vmem:[%s982] sm:$0x3]
        %v984 = vpack.c.bf16 %v978, %v978
        %986 = vrot.lane.b32.xlu0 %v984, 32
        %v987 = vpop.permute.xlu0 %986
        %v989 = vsel %vm790, %v987, 0
        %991 = vmatprep.subr.bf16.mxu0 0
        %992 = vmatpush1.bf16.msra.mxu0 %v786
        %993 = vmatprep.subr.bf16.mxu0 0
        %994 = vmatpush1.bf16.msra.mxu0 %v787
        %995 = vmatprep.subr.bf16.mxu0 0
        %996 = vmatpush1.bf16.msra.mxu0 0
        %997 = vmatprep.subr.bf16.mxu0 0
        %998 = vmatpush1.bf16.msra.mxu0 0
        %999 = vmatprep.subr.bf16.mxu0 0
        %1000 = vmatpush1.bf16.msra.mxu0 0
        %1001 = vmatprep.subr.bf16.mxu0 0
        %1002 = vmatpush1.bf16.msra.mxu0 0
        %1003 = vmatprep.subr.bf16.mxu0 0
        %1004 = vmatpush1.bf16.msra.mxu0 0
        %1005 = vmatprep.subr.bf16.mxu0 0
        %1006 = vmatpush1.bf16.msra.mxu0 0
        %1007 = vmatprep.subr.bf16.mxu0 0
        %1008 = vmatpush1.bf16.msra.mxu0 0
        %1009 = vmatprep.subr.bf16.mxu0 0
        %1010 = vmatpush1.bf16.msra.mxu0 0
        %1011 = vmatprep.subr.bf16.mxu0 0
        %1012 = vmatpush1.bf16.msra.mxu0 0
        %1013 = vmatprep.subr.bf16.mxu0 0
        %1014 = vmatpush1.bf16.msra.mxu0 0
        %1015 = vmatprep.subr.bf16.mxu0 0
        %1016 = vmatpush1.bf16.msra.mxu0 0
        %1017 = vmatprep.subr.bf16.mxu0 0
        %1018 = vmatpush1.bf16.msra.mxu0 0
        %1019 = vmatprep.subr.bf16.mxu0 0
        %1020 = vmatpush1.bf16.msra.mxu0 0
        %1021 = vmatprep.subr.bf16.mxu0 0
        %1022 = vmatpush1.bf16.msra.mxu0 0
        %1023 = vmatprep.mubr.bf16.mxu0 0
        %1024 = vmatmul.mubr.bf16.gmra.mrb[0].mxu0 %v989
        %v1025 = vpop.f32.mrb[0].mxu0
        %v1026 = vadd.f32 0.0, %v1025
        %v1027 = vpop.f32.mrb[0].mxu0
        %v1028 = vpop.f32.mrb[0].mxu0
        %v1029 = vpop.f32.mrb[0].mxu0
        %1030 = vdwg.mxu0
        %v1031 = vadd.f32 %v981, %v1026
        %v1032 = vmul.f32 %v1031, 0.5
        %v1033 = vtanh.pop %v1032
        %v1034 = vmul.f32 %v1033, 0.5
        %v1035 = vadd.f32 %v1034, 0.5
        %v1036 = vtanh.pop %v1031
        %v1037 = vmul.f32 %v1035, %v979
        %1039 = vrot.lane.b32.xlu0 %v1036, 64
        %v1040 = vpop.permute.xlu0 %1039
        %v1042 = vmul.f32 %v1035, %v1040
        %1044 = vrot.lane.b32.xlu0 %v1042, 32
        %v1045 = vpop.permute.xlu0 %1044
        %v1047 = vadd.f32 %v1037, %v1045
        %v1048 = vtanh.pop %v1047
        %1050 = vrot.lane.b32.xlu0 %v1048, 64
        %v1051 = vpop.permute.xlu0 %1050
        %v1053 = vmul.f32 %v1035, %v1051
        %1055 = vset.pattern.permute.xlu0 0
        %1056 = vperm.xlu0 %1055, %v983
        %v1057 = vpop.permute.xlu0 %1056
        %v1059 = vmul.f32 %v1053, %v1057
        %1061 = vrot.lane.b32.xlu0 %v1059, 32
        %v1062 = vpop.permute.xlu0 %1061
        %s1064 = scalar_lea.vmem %s340, 2
        %1065 = vst.msk [vmem:[%s1064] sm:$0x3] %vm872, %v1062
        %vm1066 = vcmp.gt.f32.partialorder %v983, 0.0
        %v1067 = vsel %vm1066, 1, 0
        %1068 = vset.pattern.permute.xlu0 0
        %1069 = vperm.xlu0 %1068, %v1067
        %v1070 = vpop.permute.xlu0 %1069
        %vm1071 = vcmp.eq.s32.totalorder %v1070, 1
        %v1072 = vsel %vm1071, %v1053, %v978
        %v1073 = vsel %vm1071, %v1047, %v979
        %v1074 = vld [vmem:[%s299] sm:$0x3]
        %v1075 = vld [vmem:[%s315] sm:$0x3]
        %v1076 = vpack.c.bf16 %v1072, %v1072
        %1078 = vrot.lane.b32.xlu0 %v1076, 32
        %v1079 = vpop.permute.xlu0 %1078
        %v1081 = vsel %vm790, %v1079, 0
        %1083 = vmatprep.subr.bf16.mxu0 0
        %1084 = vmatpush1.bf16.msra.mxu0 %v786
        %1085 = vmatprep.subr.bf16.mxu0 0
        %1086 = vmatpush1.bf16.msra.mxu0 %v787
        %1087 = vmatprep.subr.bf16.mxu0 0
        %1088 = vmatpush1.bf16.msra.mxu0 0
        %1089 = vmatprep.subr.bf16.mxu0 0
        %1090 = vmatpush1.bf16.msra.mxu0 0
        %1091 = vmatprep.subr.bf16.mxu0 0
        %1092 = vmatpush1.bf16.msra.mxu0 0
        %1093 = vmatprep.subr.bf16.mxu0 0
        %1094 = vmatpush1.bf16.msra.mxu0 0
        %1095 = vmatprep.subr.bf16.mxu0 0
        %1096 = vmatpush1.bf16.msra.mxu0 0
        %1097 = vmatprep.subr.bf16.mxu0 0
        %1098 = vmatpush1.bf16.msra.mxu0 0
        %1099 = vmatprep.subr.bf16.mxu0 0
        %1100 = vmatpush1.bf16.msra.mxu0 0
        %1101 = vmatprep.subr.bf16.mxu0 0
        %1102 = vmatpush1.bf16.msra.mxu0 0
        %1103 = vmatprep.subr.bf16.mxu0 0
        %1104 = vmatpush1.bf16.msra.mxu0 0
        %1105 = vmatprep.subr.bf16.mxu0 0
        %1106 = vmatpush1.bf16.msra.mxu0 0
        %1107 = vmatprep.subr.bf16.mxu0 0
        %1108 = vmatpush1.bf16.msra.mxu0 0
        %1109 = vmatprep.subr.bf16.mxu0 0
        %1110 = vmatpush1.bf16.msra.mxu0 0
        %1111 = vmatprep.subr.bf16.mxu0 0
        %1112 = vmatpush1.bf16.msra.mxu0 0
        %1113 = vmatprep.subr.bf16.mxu0 0
        %1114 = vmatpush1.bf16.msra.mxu0 0
        %1115 = vmatprep.mubr.bf16.mxu0 0
        %1116 = vmatmul.mubr.bf16.gmra.mrb[0].mxu0 %v1081
        %v1117 = vpop.f32.mrb[0].mxu0
        %v1118 = vadd.f32 0.0, %v1117
        %v1119 = vpop.f32.mrb[0].mxu0
        %v1120 = vpop.f32.mrb[0].mxu0
        %v1121 = vpop.f32.mrb[0].mxu0
        %1122 = vdwg.mxu0
        %v1123 = vadd.f32 %v1074, %v1118
        %v1124 = vmul.f32 %v1123, 0.5
        %v1125 = vtanh.pop %v1124
        %v1126 = vmul.f32 %v1125, 0.5
        %v1127 = vadd.f32 %v1126, 0.5
        %v1128 = vtanh.pop %v1123
        %v1129 = vmul.f32 %v1127, %v1073
        %1131 = vrot.lane.b32.xlu0 %v1128, 64
        %v1132 = vpop.permute.xlu0 %1131
        %v1134 = vmul.f32 %v1127, %v1132
        %1136 = vrot.lane.b32.xlu0 %v1134, 32
        %v1137 = vpop.permute.xlu0 %1136
        %v1139 = vadd.f32 %v1129, %v1137
        %v1140 = vtanh.pop %v1139
        %1142 = vrot.lane.b32.xlu0 %v1140, 64
        %v1143 = vpop.permute.xlu0 %1142
        %v1145 = vmul.f32 %v1127, %v1143
        %1147 = vset.pattern.permute.xlu0 0
        %1148 = vperm.xlu0 %1147, %v1075
        %v1149 = vpop.permute.xlu0 %1148
        %v1151 = vmul.f32 %v1145, %v1149
        %1153 = vrot.lane.b32.xlu0 %v1151, 32
        %v1154 = vpop.permute.xlu0 %1153
        %1156 = vst.msk [vmem:[%s340] sm:$0x3] %vm872, %v1154
        %vm1157 = vcmp.gt.f32.partialorder %v1075, 0.0
        %v1158 = vsel %vm1157, 1, 0
        %1159 = vset.pattern.permute.xlu0 0
        %1160 = vperm.xlu0 %1159, %v1158
        %v1161 = vpop.permute.xlu0 %1160
        %vm1162 = vcmp.eq.s32.totalorder %v1161, 1
        %v1163 = vsel %vm1162, %v1145, %v1072
        %v1164 = vsel %vm1162, %v1139, %v1073
        %1166 = vrot.lane.b32.xlu0 %v1163, 32
        %v1167 = vpop.permute.xlu0 %1166
        %1169 = vst.msk [vmem:[#allocation2] sm:$0x3] %vm872, %v1167
        %1171 = vrot.lane.b32.xlu0 %v1164, 96
        %v1172 = vpop.permute.xlu0 %1171
        %1174 = vst.msk [vmem:[#allocation3] sm:$0x3] %vm872, %v1172
      $region44: #{stacked_brnn_forward.2} parent=31 // pred_fallthru
        _
      %s1175 = ssub.s32 1, %s18
      %s1176 = smul.u32 %s1175, %s19
      %s1177 = ssub.s32 1, %s19
      %s1178 = smul.u32 %s18, %s1177
      %s1179 = sadd.s32 %s1176, %s1178
      %s1180 = smul.u32 4, %s1179
      %p1181 = scmp.lt.s32.totalorder %s18, 1
      %s1182 = scalar_select %p1181, %s18, 1
      %p1183 = scmp.lt.s32.totalorder %s1180, 7
      %s1184 = scalar_select %p1183, %s1180, 7
      %s1185 = smul.addr %s1182, 8
      %s1186 = sadd.s32 %s1184, %s1185
      %s1187 = smul.addr %s1186, 2
      %s1188 = scalar_lea.vmem %s3, %s1187
      // Predicated region
      $region45: #{stacked_brnn_forward.2} parent=31 // pred_check
        %p1189 = pneg %p156
      $region46: #{stacked_brnn_forward.2} parent=31 // pred_check_branch
        %1191 = sbr.rel (%p1189) target = $region48
      $region47: #{stacked_brnn_forward.2} parent=31 // pred_region
        %s1192 = ssub.s32 1, %s18
        %s1193 = smul.u32 %s1192, %s19
        %s1194 = ssub.s32 1, %s19
        %s1195 = smul.u32 %s18, %s1194
        %s1196 = sadd.s32 %s1193, %s1195
        %s1197 = smul.u32 4, %s1196
      $region48: #{stacked_brnn_forward.2} parent=31 // pred_fallthru
        _
    $region32: #{stacked_brnn_forward.2} parent=5 // pred_fallthru
      _
    %p1198 = scmp.le.s32.totalorder 2, %s9
    // Predicated region
    $region49: #{stacked_brnn_forward.2} parent=5 // pred_check
      %p1199 = pneg %p1198
    $region50: #{stacked_brnn_forward.2} parent=5 // pred_check_branch
      %1201 = sbr.rel (%p1199) target = $region52
    $region51: #{stacked_brnn_forward.2} parent=5 // pred_region
      %s1202 = ssub.s32 %s9, 2
      // Predicated region
      $region53: #{stacked_brnn_forward.2} parent=51 // pred_check
        %p1203 = pneg %p162
      $region54: #{stacked_brnn_forward.2} parent=51 // pred_check_branch
        %1205 = sbr.rel (%p1203) target = $region56
      $region55: #{stacked_brnn_forward.2} parent=51 // pred_region
        %s1206 = ssub.s32 1, %s20
        %s1207 = smul.u32 %s1206, %s21
        %s1208 = ssub.s32 1, %s21
        %s1209 = smul.u32 %s20, %s1208
        %s1210 = sadd.s32 %s1207, %s1209
        %s1211 = smul.u32 4, %s1210
        %p1212 = scmp.lt.s32.totalorder %s20, 1
        %s1213 = scalar_select %p1212, %s20, 1
        %p1214 = scmp.lt.s32.totalorder %s1211, 7
        %s1215 = scalar_select %p1214, %s1211, 7
        %s1216 = smul.addr %s1213, 8
        %s1217 = sadd.s32 %s1215, %s1216
        %s1218 = smul.addr %s1217, 2
        %s1219 = scalar_lea.vmem %s3, %s1218
      $region56: #{stacked_brnn_forward.2} parent=51 // pred_fallthru
        _
    $region52: #{stacked_brnn_forward.2} parent=5 // pred_fallthru
      _
  $region6: #{stacked_brnn_forward.2} parent=0 // loop_footer
    %s13 = sadd.s32 1, %s9
  $region7: #{stacked_brnn_forward.2} parent=0 // loop_footer_branch
    %8 = sbr.rel target = $region3
  $region8: #{stacked_brnn_forward.2} parent=0 // loop_exit
    _

</llo_original>
